<compile_context>
chip_gen: v6e
topology: v6e:2x2x1
jax: 0.10.0
libtpu: 0.0.40
codegen_flags: <defaults>
</compile_context>

<pallas_src>
import functools

import jax
import jax.numpy as jnp
from jax.experimental import pallas as pl
from jax.experimental.pallas import tpu as pltpu

EPS = 1e-5


def _round_up(x, m):
    return pl.cdiv(x, m) * m


def attdest_kernel(d_ref, agts_ref, w1bd_ref, aff_ref, w2_ref, w3d_ref, w3a_ref,
                   out_ref, h_ref, aw_ref):
    n = agts_ref.shape[1]
    num_mods = d_ref.shape[1] // 2

    # Per-feature (1, n) rows: single-sublane operands broadcast inside each
    # elementwise op (no (ta, n) constant materialization -> no vreg spill).
    b1 = aff_ref[0:1, :]
    g2w = aff_ref[1:2, :]
    g2b = aff_ref[2:3, :]
    g3w = aff_ref[3:4, :]
    g3b = aff_ref[4:5, :]

    w2 = w2_ref[...]
    w3d = w3d_ref[...]

    # Layer 1 (Linear 2->n) for ALL modes via one block-diagonal MXU matmul:
    # columns [m*n, (m+1)*n) of h_ref hold mode m's pre-bias features.
    h_ref[...] = jnp.dot(d_ref[...], w1bd_ref[...],
                         preferred_element_type=jnp.float32)

    # agts' contribution to self.agt, computed ONCE per agent block and reused
    # for every mode:  concat([h, a]) @ W3 == h @ W3d + a @ W3a.
    # (bf16 cast, if requested, happens here in-kernel — no wrapper pass.)
    aw_ref[...] = jnp.dot(agts_ref[...].astype(w3a_ref.dtype), w3a_ref[...],
                          preferred_element_type=jnp.float32)

    def gn_relu(x, gamma, beta):
        # GroupNorm(ng=1) + affine + ReLU with var = E[x^2] - E[x]^2 and the
        # (x - mu) term folded into per-row scale/shift: 2 lane reductions,
        # no duplicate (x - mu) materialization.
        mu = jnp.mean(x, axis=-1, keepdims=True)
        msq = jnp.mean(x * x, axis=-1, keepdims=True)
        r = jax.lax.rsqrt(jnp.maximum(msq - mu * mu, 0.0) + EPS)   # (ta, 1)
        return jnp.maximum((x * r - mu * r) * gamma + beta, 0.0)

    for m in range(num_mods):  # num_mods is small & static -> unrolled
        # self.dist[0:2]: Linear(2->n, bias) + ReLU — matmul already done on
        # the MXU above; only bias + ReLU on a lane-aligned slice remain.
        h = jnp.maximum(h_ref[:, m * n:(m + 1) * n] + b1, 0.0)

        # self.dist[2]: Linear(n->n, no bias) + GroupNorm(1) + ReLU.
        h = jnp.dot(h.astype(w2.dtype), w2, preferred_element_type=jnp.float32)
        h = gn_relu(h, g2w, g2b)

        # self.agt: Linear(2n->n, no bias) + GroupNorm(1) + ReLU.
        z = jnp.dot(h.astype(w3d.dtype), w3d,
                    preferred_element_type=jnp.float32) + aw_ref[...]

        # Lane-dense, 128-aligned store of mode m's slab.
        out_ref[:, m * n:(m + 1) * n] = gn_relu(z, g3w, g3b)


@functools.partial(jax.jit, static_argnames=("ta", "matmul_dtype"))
def att_dest(agts, agt_ctrs, dest_ctrs, params, *, ta=512,
             matmul_dtype=jnp.float32):
    """agts: (N, n_agt) f32, agt_ctrs: (N, 2) f32, dest_ctrs: (N, num_mods, 2) f32.
    Returns (N*num_mods, n_agt) f32, matching the PyTorch module."""
    N, n_agt = agts.shape
    num_mods = dest_ctrs.shape[1]

    # Row tile: multiple of 8.  Cap it so the (parallel) grid has >=2 steps
    # when N allows — keeps both v7x TensorCores busy; negligible on 1-TC
    # chips.  The ragged tail is handled by Pallas boundary-block masking.
    ta = max(8, (int(ta) // 8) * 8)
    ta_eff = max(8, min(ta, _round_up(max(N // 2, 8), 8)))
    grid = pl.cdiv(N, ta_eff)

    # Mode deltas, agent-major over modes, columns [dx0, dy0, dx1, dy1, ...].
    d = (agt_ctrs[:, None, :] - dest_ctrs).reshape(N, num_mods * 2)
    d = d.astype(jnp.float32)

    # Block-diagonal Linear(2->n) weight: kron(I_M, w1) puts w1 at block (m, m)
    # so d @ W1_bd lands mode m's features in columns [m*n, (m+1)*n).
    w1bd = jnp.kron(jnp.eye(num_mods, dtype=jnp.float32),
                    params["w1"].astype(jnp.float32))

    # Five per-feature vectors packed into one (5, n_agt) operand.
    aff = jnp.stack([params["b1"], params["g2w"], params["g2b"],
                     params["g3w"], params["g3b"]], axis=0).astype(jnp.float32)

    w2 = params["w2"].astype(matmul_dtype)                      # (n, n)
    w3 = params["w3"]                                           # (2n, n)
    w3d = w3[:n_agt].astype(matmul_dtype)                       # dist features
    w3a = w3[n_agt:].astype(matmul_dtype)                       # agt features

    row_d = pl.BlockSpec((ta_eff, 2 * num_mods), lambda i: (i, 0))
    row_a = pl.BlockSpec((ta_eff, n_agt), lambda i: (i, 0))
    row_o = pl.BlockSpec((ta_eff, num_mods * n_agt), lambda i: (i, 0))
    full = lambda shape: pl.BlockSpec(shape, lambda i: (0, 0))

    flops = 4 * N * num_mods * n_agt * n_agt + 2 * N * n_agt * n_agt
    bytes_accessed = 4 * (agts.size + d.size + N * num_mods * n_agt
                          + w1bd.size + aff.size + 3 * n_agt * n_agt)
    cost = pl.CostEstimate(flops=int(flops),
                           transcendentals=int(2 * N * num_mods),
                           bytes_accessed=int(bytes_accessed))

    out = pl.pallas_call(
        attdest_kernel,
        out_shape=jax.ShapeDtypeStruct((N, num_mods * n_agt), jnp.float32),
        grid_spec=pltpu.PrefetchScalarGridSpec(
            num_scalar_prefetch=0,
            grid=(grid,),
            in_specs=[
                row_d, row_a,
                full((2 * num_mods, num_mods * n_agt)),
                full((5, n_agt)),
                full((n_agt, n_agt)), full((n_agt, n_agt)), full((n_agt, n_agt)),
            ],
            out_specs=row_o,
            scratch_shapes=[
                pltpu.VMEM((ta_eff, num_mods * n_agt), jnp.float32),  # h_all
                pltpu.VMEM((ta_eff, n_agt), jnp.float32),             # agts@W3a
            ],
        ),
        compiler_params=pltpu.CompilerParams(
            dimension_semantics=("parallel",),
            vmem_limit_bytes=32 * 1024 * 1024),
        cost_estimate=cost,
    )(d, agts, w1bd, aff, w2, w3d, w3a)

    # (N, num_mods*n_agt) -> (N*num_mods, n_agt) is a free row-major view and
    # matches the torch row ordering (agent-major over modes).
    return out.reshape(N * num_mods, n_agt)


def att_dest_ref(agts, agt_ctrs, dest_ctrs, params):
    """Pure-JAX f32 reference for correctness check."""
    N, n_agt = agts.shape
    num_mods = dest_ctrs.shape[1]
    dist = (agt_ctrs[:, None, :] - dest_ctrs).reshape(-1, 2)

    def gn1(x, w, b):
        mu = jnp.mean(x, axis=-1, keepdims=True)
        var = jnp.mean(jnp.square(x - mu), axis=-1, keepdims=True)
        return (x - mu) / jnp.sqrt(var + EPS) * w + b

    h = jnp.maximum(dist @ params["w1"] + params["b1"], 0.0)
    h = jnp.maximum(gn1(h @ params["w2"], params["g2w"], params["g2b"]), 0.0)
    a = jnp.repeat(agts, num_mods, axis=0)
    z = jnp.concatenate([h, a], axis=1) @ params["w3"]
    return jnp.maximum(gn1(z, params["g3w"], params["g3b"]), 0.0)


def init_params(key, n_agt):
    ks = jax.random.split(key, 8)
    scale1 = 1.0 / jnp.sqrt(2.0)
    scale2 = 1.0 / jnp.sqrt(float(n_agt))
    scale3 = 1.0 / jnp.sqrt(float(2 * n_agt))
    return {
        "w1": jax.random.uniform(ks[0], (2, n_agt), jnp.float32, -scale1, scale1),
        "b1": jax.random.uniform(ks[1], (n_agt,), jnp.float32, -scale1, scale1),
        "w2": jax.random.uniform(ks[2], (n_agt, n_agt), jnp.float32, -scale2, scale2),
        "g2w": 1.0 + 0.1 * jax.random.normal(ks[3], (n_agt,), jnp.float32),
        "g2b": 0.1 * jax.random.normal(ks[4], (n_agt,), jnp.float32),
        "w3": jax.random.uniform(ks[5], (2 * n_agt, n_agt), jnp.float32, -scale3, scale3),
        "g3w": 1.0 + 0.1 * jax.random.normal(ks[6], (n_agt,), jnp.float32),
        "g3b": 0.1 * jax.random.normal(ks[7], (n_agt,), jnp.float32),
    }


if __name__ == "__main__":
    n_agt = 128        # feature width (lane-dense)
    num_mods = 6       # prediction modes

    key = jax.random.PRNGKey(0)
    k_p, k_a, k_c, k_d = jax.random.split(key, 4)
    params = init_params(k_p, n_agt)

    # Case 1: tiny problem (N=4), single boundary-masked grid step.
    N = 4
    agts = jax.random.normal(k_a, (N, n_agt), jnp.float32)
    agt_ctrs = jax.random.normal(k_c, (N, 2), jnp.float32)
    dest_ctrs = jax.random.normal(k_d, (N, num_mods, 2), jnp.float32)
    ref = att_dest_ref(agts, agt_ctrs, dest_ctrs, params)

    out_f32 = att_dest(agts, agt_ctrs, dest_ctrs, params)          # f32 default
    out_bf16 = att_dest(agts, agt_ctrs, dest_ctrs, params,
                        matmul_dtype=jnp.bfloat16)                  # bf16 opt-in
    out_f32, out_bf16 = jax.block_until_ready((out_f32, out_bf16))

    assert out_f32.shape == (N * num_mods, n_agt)
    assert jnp.allclose(out_f32, ref, atol=1e-4, rtol=1e-4), "f32 mismatch"
    assert jnp.allclose(out_bf16, ref, atol=5e-2, rtol=5e-2), "bf16 mismatch"

    # Case 2: multi-step grid with a ragged tail (N=40, ta=16 -> grid=3,
    # last block has 8 valid rows).
    N2 = 40
    agts2 = jax.random.normal(jax.random.PRNGKey(1), (N2, n_agt), jnp.float32)
    ctrs2 = jax.random.normal(jax.random.PRNGKey(2), (N2, 2), jnp.float32)
    dests2 = jax.random.normal(jax.random.PRNGKey(3), (N2, num_mods, 2), jnp.float32)
    ref2 = att_dest_ref(agts2, ctrs2, dests2, params)
    out2 = att_dest(agts2, ctrs2, dests2, params, ta=16)
    out2 = jax.block_until_ready(out2)
    assert out2.shape == (N2 * num_mods, n_agt)
    assert jnp.allclose(out2, ref2, atol=1e-4, rtol=1e-4), "multi-step mismatch"

    print("KERNEL_OK")
</pallas_src>

<mosaic_0001>
module attributes {stable_mosaic.version = 11 : i64} {
  func.func @attdest_kernel(%arg0: i32, %arg1: memref<8x12xf32, #tpu.memory_space<vmem>>, %arg2: memref<8x128xf32, #tpu.memory_space<vmem>>, %arg3: memref<12x768xf32, #tpu.memory_space<vmem>>, %arg4: memref<5x128xf32, #tpu.memory_space<vmem>>, %arg5: memref<128x128xf32, #tpu.memory_space<vmem>>, %arg6: memref<128x128xf32, #tpu.memory_space<vmem>>, %arg7: memref<128x128xf32, #tpu.memory_space<vmem>>, %arg8: memref<8x768xf32, #tpu.memory_space<vmem>>, %arg9: memref<8x768xf32, #tpu.memory_space<vmem>>, %arg10: memref<8x128xf32, #tpu.memory_space<vmem>>) attributes {dimension_semantics = [#tpu.dimension_semantics<parallel>], iteration_bounds = array<i64: 1>, scalar_prefetch = 0 : i64, scratch_operands = 2 : i64, tpu.core_type = #tpu.core_type<tc>, window_params = [{transform_indices = @transform_0, window_bounds = array<i64: 8, 12>}, {transform_indices = @transform_1, window_bounds = array<i64: 8, 128>}, {pipeline_mode = #tpu.pipeline_mode<synchronous>, transform_indices = @transform_2, window_bounds = array<i64: 12, 768>}, {pipeline_mode = #tpu.pipeline_mode<synchronous>, transform_indices = @transform_3, window_bounds = array<i64: 5, 128>}, {pipeline_mode = #tpu.pipeline_mode<synchronous>, transform_indices = @transform_4, window_bounds = array<i64: 128, 128>}, {pipeline_mode = #tpu.pipeline_mode<synchronous>, transform_indices = @transform_5, window_bounds = array<i64: 128, 128>}, {pipeline_mode = #tpu.pipeline_mode<synchronous>, transform_indices = @transform_6, window_bounds = array<i64: 128, 128>}, {transform_indices = @transform_7, window_bounds = array<i64: 8, 768>}]} {
    %c0 = arith.constant 0 : index
    %c0_0 = arith.constant 0 : index
    %0 = vector.load %arg4[%c0, %c0_0] : memref<5x128xf32, #tpu.memory_space<vmem>>, vector<1x128xf32>
    %c1 = arith.constant 1 : index
    %c0_1 = arith.constant 0 : index
    %1 = vector.load %arg4[%c1, %c0_1] : memref<5x128xf32, #tpu.memory_space<vmem>>, vector<1x128xf32>
    %c2 = arith.constant 2 : index
    %c0_2 = arith.constant 0 : index
    %2 = vector.load %arg4[%c2, %c0_2] : memref<5x128xf32, #tpu.memory_space<vmem>>, vector<1x128xf32>
    %c3 = arith.constant 3 : index
    %c0_3 = arith.constant 0 : index
    %3 = vector.load %arg4[%c3, %c0_3] : memref<5x128xf32, #tpu.memory_space<vmem>>, vector<1x128xf32>
    %c4 = arith.constant 4 : index
    %c0_4 = arith.constant 0 : index
    %4 = vector.load %arg4[%c4, %c0_4] : memref<5x128xf32, #tpu.memory_space<vmem>>, vector<1x128xf32>
    %c0_5 = arith.constant 0 : index
    %c0_6 = arith.constant 0 : index
    %5 = vector.load %arg5[%c0_5, %c0_6] : memref<128x128xf32, #tpu.memory_space<vmem>>, vector<128x128xf32>
    %c0_7 = arith.constant 0 : index
    %c0_8 = arith.constant 0 : index
    %6 = vector.load %arg6[%c0_7, %c0_8] : memref<128x128xf32, #tpu.memory_space<vmem>>, vector<128x128xf32>
    %c0_9 = arith.constant 0 : index
    %c0_10 = arith.constant 0 : index
    %7 = vector.load %arg1[%c0_9, %c0_10] : memref<8x12xf32, #tpu.memory_space<vmem>>, vector<8x12xf32>
    %c0_11 = arith.constant 0 : index
    %c0_12 = arith.constant 0 : index
    %8 = vector.load %arg3[%c0_11, %c0_12] : memref<12x768xf32, #tpu.memory_space<vmem>>, vector<12x768xf32>
    %cst = arith.constant dense<0.000000e+00> : vector<8x768xf32>
    %9 = tpu.matmul %7, %8, %cst {dimension_numbers = #tpu.dot_dimension_numbers<[1], [0], [0], [1], [0, 0, 1, 1], [], []>} : vector<8x12xf32>, vector<12x768xf32>, vector<8x768xf32> -> vector<8x768xf32>
    %c0_13 = arith.constant 0 : index
    %c0_14 = arith.constant 0 : index
    %10 = vector.load %arg9[%c0_13, %c0_14] : memref<8x768xf32, #tpu.memory_space<vmem>>, vector<8x768xf32>
    tpu.vector_store %arg9[%c0_13, %c0_14], %9 {strides = array<i32>} : memref<8x768xf32, #tpu.memory_space<vmem>>, vector<8x768xf32>,
    %c0_15 = arith.constant 0 : index
    %c0_16 = arith.constant 0 : index
    %11 = vector.load %arg2[%c0_15, %c0_16] : memref<8x128xf32, #tpu.memory_space<vmem>>, vector<8x128xf32>
    %c0_17 = arith.constant 0 : index
    %c0_18 = arith.constant 0 : index
    %12 = vector.load %arg7[%c0_17, %c0_18] : memref<128x128xf32, #tpu.memory_space<vmem>>, vector<128x128xf32>
    %cst_19 = arith.constant dense<0.000000e+00> : vector<8x128xf32>
    %13 = tpu.matmul %11, %12, %cst_19 {dimension_numbers = #tpu.dot_dimension_numbers<[1], [0], [0], [1], [0, 0, 1, 1], [], []>} : vector<8x128xf32>, vector<128x128xf32>, vector<8x128xf32> -> vector<8x128xf32>
    %c0_20 = arith.constant 0 : index
    %c0_21 = arith.constant 0 : index
    %14 = vector.load %arg10[%c0_20, %c0_21] : memref<8x128xf32, #tpu.memory_space<vmem>>, vector<8x128xf32>
    tpu.vector_store %arg10[%c0_20, %c0_21], %13 {strides = array<i32>} : memref<8x128xf32, #tpu.memory_space<vmem>>, vector<8x128xf32>,
    %c0_22 = arith.constant 0 : index
    %c0_23 = arith.constant 0 : index
    %15 = vector.load %arg9[%c0_22, %c0_23] : memref<8x768xf32, #tpu.memory_space<vmem>>, vector<8x128xf32>
    %16 = vector.broadcast %0 : vector<1x128xf32> to vector<8x128xf32>
    %17 = arith.addf %15, %16 : vector<8x128xf32>
    %cst_24 = arith.constant 0.000000e+00 : f32
    %18 = vector.broadcast %cst_24 : f32 to vector<8x128xf32>
    %19 = arith.maximumf %17, %18 : vector<8x128xf32>
    %cst_25 = arith.constant dense<0.000000e+00> : vector<8x128xf32>
    %20 = tpu.matmul %19, %5, %cst_25 {dimension_numbers = #tpu.dot_dimension_numbers<[1], [0], [0], [1], [0, 0, 1, 1], [], []>} : vector<8x128xf32>, vector<128x128xf32>, vector<8x128xf32> -> vector<8x128xf32>
    %cst_26 = arith.constant dense<0.000000e+00> : vector<8xf32>
    %21 = vector.multi_reduction <add>, %20, %cst_26 [1] : vector<8x128xf32> to vector<8xf32>
    %22 = vector.shape_cast %21 : vector<8xf32> to vector<8x1xf32>
    %cst_27 = arith.constant 1.280000e+02 : f32
    %23 = vector.broadcast %cst_27 : f32 to vector<8x1xf32>
    %24 = arith.divf %22, %23 : vector<8x1xf32>
    %25 = arith.mulf %20, %20 : vector<8x128xf32>
    %cst_28 = arith.constant dense<0.000000e+00> : vector<8xf32>
    %26 = vector.multi_reduction <add>, %25, %cst_28 [1] : vector<8x128xf32> to vector<8xf32>
    %27 = vector.shape_cast %26 : vector<8xf32> to vector<8x1xf32>
    %cst_29 = arith.constant 1.280000e+02 : f32
    %28 = vector.broadcast %cst_29 : f32 to vector<8x1xf32>
    %29 = arith.divf %27, %28 : vector<8x1xf32>
    %30 = arith.mulf %24, %24 : vector<8x1xf32>
    %31 = arith.subf %29, %30 : vector<8x1xf32>
    %cst_30 = arith.constant 0.000000e+00 : f32
    %32 = vector.broadcast %cst_30 : f32 to vector<8x1xf32>
    %33 = arith.maximumf %31, %32 : vector<8x1xf32>
    %cst_31 = arith.constant 9.99999974E-6 : f32
    %34 = vector.broadcast %cst_31 : f32 to vector<8x1xf32>
    %35 = arith.addf %33, %34 : vector<8x1xf32>
    %36 = math.rsqrt %35 : vector<8x1xf32>
    %37 = vector.broadcast %36 : vector<8x1xf32> to vector<8x128xf32>
    %38 = arith.mulf %20, %37 : vector<8x128xf32>
    %39 = arith.mulf %24, %36 : vector<8x1xf32>
    %40 = vector.broadcast %39 : vector<8x1xf32> to vector<8x128xf32>
    %41 = arith.subf %38, %40 : vector<8x128xf32>
    %42 = vector.broadcast %1 : vector<1x128xf32> to vector<8x128xf32>
    %43 = arith.mulf %41, %42 : vector<8x128xf32>
    %44 = vector.broadcast %2 : vector<1x128xf32> to vector<8x128xf32>
    %45 = arith.addf %43, %44 : vector<8x128xf32>
    %cst_32 = arith.constant 0.000000e+00 : f32
    %46 = vector.broadcast %cst_32 : f32 to vector<8x128xf32>
    %47 = arith.maximumf %45, %46 : vector<8x128xf32>
    %cst_33 = arith.constant dense<0.000000e+00> : vector<8x128xf32>
    %48 = tpu.matmul %47, %6, %cst_33 {dimension_numbers = #tpu.dot_dimension_numbers<[1], [0], [0], [1], [0, 0, 1, 1], [], []>} : vector<8x128xf32>, vector<128x128xf32>, vector<8x128xf32> -> vector<8x128xf32>
    %c0_34 = arith.constant 0 : index
    %c0_35 = arith.constant 0 : index
    %49 = vector.load %arg10[%c0_34, %c0_35] : memref<8x128xf32, #tpu.memory_space<vmem>>, vector<8x128xf32>
    %50 = arith.addf %48, %49 : vector<8x128xf32>
    %cst_36 = arith.constant dense<0.000000e+00> : vector<8xf32>
    %51 = vector.multi_reduction <add>, %50, %cst_36 [1] : vector<8x128xf32> to vector<8xf32>
    %52 = vector.shape_cast %51 : vector<8xf32> to vector<8x1xf32>
    %cst_37 = arith.constant 1.280000e+02 : f32
    %53 = vector.broadcast %cst_37 : f32 to vector<8x1xf32>
    %54 = arith.divf %52, %53 : vector<8x1xf32>
    %55 = arith.mulf %50, %50 : vector<8x128xf32>
    %cst_38 = arith.constant dense<0.000000e+00> : vector<8xf32>
    %56 = vector.multi_reduction <add>, %55, %cst_38 [1] : vector<8x128xf32> to vector<8xf32>
    %57 = vector.shape_cast %56 : vector<8xf32> to vector<8x1xf32>
    %cst_39 = arith.constant 1.280000e+02 : f32
    %58 = vector.broadcast %cst_39 : f32 to vector<8x1xf32>
    %59 = arith.divf %57, %58 : vector<8x1xf32>
    %60 = arith.mulf %54, %54 : vector<8x1xf32>
    %61 = arith.subf %59, %60 : vector<8x1xf32>
    %cst_40 = arith.constant 0.000000e+00 : f32
    %62 = vector.broadcast %cst_40 : f32 to vector<8x1xf32>
    %63 = arith.maximumf %61, %62 : vector<8x1xf32>
    %cst_41 = arith.constant 9.99999974E-6 : f32
    %64 = vector.broadcast %cst_41 : f32 to vector<8x1xf32>
    %65 = arith.addf %63, %64 : vector<8x1xf32>
    %66 = math.rsqrt %65 : vector<8x1xf32>
    %67 = vector.broadcast %66 : vector<8x1xf32> to vector<8x128xf32>
    %68 = arith.mulf %50, %67 : vector<8x128xf32>
    %69 = arith.mulf %54, %66 : vector<8x1xf32>
    %70 = vector.broadcast %69 : vector<8x1xf32> to vector<8x128xf32>
    %71 = arith.subf %68, %70 : vector<8x128xf32>
    %72 = vector.broadcast %3 : vector<1x128xf32> to vector<8x128xf32>
    %73 = arith.mulf %71, %72 : vector<8x128xf32>
    %74 = vector.broadcast %4 : vector<1x128xf32> to vector<8x128xf32>
    %75 = arith.addf %73, %74 : vector<8x128xf32>
    %cst_42 = arith.constant 0.000000e+00 : f32
    %76 = vector.broadcast %cst_42 : f32 to vector<8x128xf32>
    %77 = arith.maximumf %75, %76 : vector<8x128xf32>
    %c0_43 = arith.constant 0 : index
    %c0_44 = arith.constant 0 : index
    %78 = vector.load %arg8[%c0_43, %c0_44] : memref<8x768xf32, #tpu.memory_space<vmem>>, vector<8x128xf32>
    tpu.vector_store %arg8[%c0_43, %c0_44], %77 {strides = array<i32>} : memref<8x768xf32, #tpu.memory_space<vmem>>, vector<8x128xf32>,
    %c0_45 = arith.constant 0 : index
    %c128 = arith.constant 128 : index
    %79 = vector.load %arg9[%c0_45, %c128] : memref<8x768xf32, #tpu.memory_space<vmem>>, vector<8x128xf32>
    %80 = vector.broadcast %0 : vector<1x128xf32> to vector<8x128xf32>
    %81 = arith.addf %79, %80 : vector<8x128xf32>
    %cst_46 = arith.constant 0.000000e+00 : f32
    %82 = vector.broadcast %cst_46 : f32 to vector<8x128xf32>
    %83 = arith.maximumf %81, %82 : vector<8x128xf32>
    %cst_47 = arith.constant dense<0.000000e+00> : vector<8x128xf32>
    %84 = tpu.matmul %83, %5, %cst_47 {dimension_numbers = #tpu.dot_dimension_numbers<[1], [0], [0], [1], [0, 0, 1, 1], [], []>} : vector<8x128xf32>, vector<128x128xf32>, vector<8x128xf32> -> vector<8x128xf32>
    %cst_48 = arith.constant dense<0.000000e+00> : vector<8xf32>
    %85 = vector.multi_reduction <add>, %84, %cst_48 [1] : vector<8x128xf32> to vector<8xf32>
    %86 = vector.shape_cast %85 : vector<8xf32> to vector<8x1xf32>
    %cst_49 = arith.constant 1.280000e+02 : f32
    %87 = vector.broadcast %cst_49 : f32 to vector<8x1xf32>
    %88 = arith.divf %86, %87 : vector<8x1xf32>
    %89 = arith.mulf %84, %84 : vector<8x128xf32>
    %cst_50 = arith.constant dense<0.000000e+00> : vector<8xf32>
    %90 = vector.multi_reduction <add>, %89, %cst_50 [1] : vector<8x128xf32> to vector<8xf32>
    %91 = vector.shape_cast %90 : vector<8xf32> to vector<8x1xf32>
    %cst_51 = arith.constant 1.280000e+02 : f32
    %92 = vector.broadcast %cst_51 : f32 to vector<8x1xf32>
    %93 = arith.divf %91, %92 : vector<8x1xf32>
    %94 = arith.mulf %88, %88 : vector<8x1xf32>
    %95 = arith.subf %93, %94 : vector<8x1xf32>
    %cst_52 = arith.constant 0.000000e+00 : f32
    %96 = vector.broadcast %cst_52 : f32 to vector<8x1xf32>
    %97 = arith.maximumf %95, %96 : vector<8x1xf32>
    %cst_53 = arith.constant 9.99999974E-6 : f32
    %98 = vector.broadcast %cst_53 : f32 to vector<8x1xf32>
    %99 = arith.addf %97, %98 : vector<8x1xf32>
    %100 = math.rsqrt %99 : vector<8x1xf32>
    %101 = vector.broadcast %100 : vector<8x1xf32> to vector<8x128xf32>
    %102 = arith.mulf %84, %101 : vector<8x128xf32>
    %103 = arith.mulf %88, %100 : vector<8x1xf32>
    %104 = vector.broadcast %103 : vector<8x1xf32> to vector<8x128xf32>
    %105 = arith.subf %102, %104 : vector<8x128xf32>
    %106 = vector.broadcast %1 : vector<1x128xf32> to vector<8x128xf32>
    %107 = arith.mulf %105, %106 : vector<8x128xf32>
    %108 = vector.broadcast %2 : vector<1x128xf32> to vector<8x128xf32>
    %109 = arith.addf %107, %108 : vector<8x128xf32>
    %cst_54 = arith.constant 0.000000e+00 : f32
    %110 = vector.broadcast %cst_54 : f32 to vector<8x128xf32>
    %111 = arith.maximumf %109, %110 : vector<8x128xf32>
    %cst_55 = arith.constant dense<0.000000e+00> : vector<8x128xf32>
    %112 = tpu.matmul %111, %6, %cst_55 {dimension_numbers = #tpu.dot_dimension_numbers<[1], [0], [0], [1], [0, 0, 1, 1], [], []>} : vector<8x128xf32>, vector<128x128xf32>, vector<8x128xf32> -> vector<8x128xf32>
    %c0_56 = arith.constant 0 : index
    %c0_57 = arith.constant 0 : index
    %113 = vector.load %arg10[%c0_56, %c0_57] : memref<8x128xf32, #tpu.memory_space<vmem>>, vector<8x128xf32>
    %114 = arith.addf %112, %113 : vector<8x128xf32>
    %cst_58 = arith.constant dense<0.000000e+00> : vector<8xf32>
    %115 = vector.multi_reduction <add>, %114, %cst_58 [1] : vector<8x128xf32> to vector<8xf32>
    %116 = vector.shape_cast %115 : vector<8xf32> to vector<8x1xf32>
    %cst_59 = arith.constant 1.280000e+02 : f32
    %117 = vector.broadcast %cst_59 : f32 to vector<8x1xf32>
    %118 = arith.divf %116, %117 : vector<8x1xf32>
    %119 = arith.mulf %114, %114 : vector<8x128xf32>
    %cst_60 = arith.constant dense<0.000000e+00> : vector<8xf32>
    %120 = vector.multi_reduction <add>, %119, %cst_60 [1] : vector<8x128xf32> to vector<8xf32>
    %121 = vector.shape_cast %120 : vector<8xf32> to vector<8x1xf32>
    %cst_61 = arith.constant 1.280000e+02 : f32
    %122 = vector.broadcast %cst_61 : f32 to vector<8x1xf32>
    %123 = arith.divf %121, %122 : vector<8x1xf32>
    %124 = arith.mulf %118, %118 : vector<8x1xf32>
    %125 = arith.subf %123, %124 : vector<8x1xf32>
    %cst_62 = arith.constant 0.000000e+00 : f32
    %126 = vector.broadcast %cst_62 : f32 to vector<8x1xf32>
    %127 = arith.maximumf %125, %126 : vector<8x1xf32>
    %cst_63 = arith.constant 9.99999974E-6 : f32
    %128 = vector.broadcast %cst_63 : f32 to vector<8x1xf32>
    %129 = arith.addf %127, %128 : vector<8x1xf32>
    %130 = math.rsqrt %129 : vector<8x1xf32>
    %131 = vector.broadcast %130 : vector<8x1xf32> to vector<8x128xf32>
    %132 = arith.mulf %114, %131 : vector<8x128xf32>
    %133 = arith.mulf %118, %130 : vector<8x1xf32>
    %134 = vector.broadcast %133 : vector<8x1xf32> to vector<8x128xf32>
    %135 = arith.subf %132, %134 : vector<8x128xf32>
    %136 = vector.broadcast %3 : vector<1x128xf32> to vector<8x128xf32>
    %137 = arith.mulf %135, %136 : vector<8x128xf32>
    %138 = vector.broadcast %4 : vector<1x128xf32> to vector<8x128xf32>
    %139 = arith.addf %137, %138 : vector<8x128xf32>
    %cst_64 = arith.constant 0.000000e+00 : f32
    %140 = vector.broadcast %cst_64 : f32 to vector<8x128xf32>
    %141 = arith.maximumf %139, %140 : vector<8x128xf32>
    %c0_65 = arith.constant 0 : index
    %c128_66 = arith.constant 128 : index
    %142 = vector.load %arg8[%c0_65, %c128_66] : memref<8x768xf32, #tpu.memory_space<vmem>>, vector<8x128xf32>
    tpu.vector_store %arg8[%c0_65, %c128_66], %141 {strides = array<i32>} : memref<8x768xf32, #tpu.memory_space<vmem>>, vector<8x128xf32>,
    %c0_67 = arith.constant 0 : index
    %c256 = arith.constant 256 : index
    %143 = vector.load %arg9[%c0_67, %c256] : memref<8x768xf32, #tpu.memory_space<vmem>>, vector<8x128xf32>
    %144 = vector.broadcast %0 : vector<1x128xf32> to vector<8x128xf32>
    %145 = arith.addf %143, %144 : vector<8x128xf32>
    %cst_68 = arith.constant 0.000000e+00 : f32
    %146 = vector.broadcast %cst_68 : f32 to vector<8x128xf32>
    %147 = arith.maximumf %145, %146 : vector<8x128xf32>
    %cst_69 = arith.constant dense<0.000000e+00> : vector<8x128xf32>
    %148 = tpu.matmul %147, %5, %cst_69 {dimension_numbers = #tpu.dot_dimension_numbers<[1], [0], [0], [1], [0, 0, 1, 1], [], []>} : vector<8x128xf32>, vector<128x128xf32>, vector<8x128xf32> -> vector<8x128xf32>
    %cst_70 = arith.constant dense<0.000000e+00> : vector<8xf32>
    %149 = vector.multi_reduction <add>, %148, %cst_70 [1] : vector<8x128xf32> to vector<8xf32>
    %150 = vector.shape_cast %149 : vector<8xf32> to vector<8x1xf32>
    %cst_71 = arith.constant 1.280000e+02 : f32
    %151 = vector.broadcast %cst_71 : f32 to vector<8x1xf32>
    %152 = arith.divf %150, %151 : vector<8x1xf32>
    %153 = arith.mulf %148, %148 : vector<8x128xf32>
    %cst_72 = arith.constant dense<0.000000e+00> : vector<8xf32>
    %154 = vector.multi_reduction <add>, %153, %cst_72 [1] : vector<8x128xf32> to vector<8xf32>
    %155 = vector.shape_cast %154 : vector<8xf32> to vector<8x1xf32>
    %cst_73 = arith.constant 1.280000e+02 : f32
    %156 = vector.broadcast %cst_73 : f32 to vector<8x1xf32>
    %157 = arith.divf %155, %156 : vector<8x1xf32>
    %158 = arith.mulf %152, %152 : vector<8x1xf32>
    %159 = arith.subf %157, %158 : vector<8x1xf32>
    %cst_74 = arith.constant 0.000000e+00 : f32
    %160 = vector.broadcast %cst_74 : f32 to vector<8x1xf32>
    %161 = arith.maximumf %159, %160 : vector<8x1xf32>
    %cst_75 = arith.constant 9.99999974E-6 : f32
    %162 = vector.broadcast %cst_75 : f32 to vector<8x1xf32>
    %163 = arith.addf %161, %162 : vector<8x1xf32>
    %164 = math.rsqrt %163 : vector<8x1xf32>
    %165 = vector.broadcast %164 : vector<8x1xf32> to vector<8x128xf32>
    %166 = arith.mulf %148, %165 : vector<8x128xf32>
    %167 = arith.mulf %152, %164 : vector<8x1xf32>
    %168 = vector.broadcast %167 : vector<8x1xf32> to vector<8x128xf32>
    %169 = arith.subf %166, %168 : vector<8x128xf32>
    %170 = vector.broadcast %1 : vector<1x128xf32> to vector<8x128xf32>
    %171 = arith.mulf %169, %170 : vector<8x128xf32>
    %172 = vector.broadcast %2 : vector<1x128xf32> to vector<8x128xf32>
    %173 = arith.addf %171, %172 : vector<8x128xf32>
    %cst_76 = arith.constant 0.000000e+00 : f32
    %174 = vector.broadcast %cst_76 : f32 to vector<8x128xf32>
    %175 = arith.maximumf %173, %174 : vector<8x128xf32>
    %cst_77 = arith.constant dense<0.000000e+00> : vector<8x128xf32>
    %176 = tpu.matmul %175, %6, %cst_77 {dimension_numbers = #tpu.dot_dimension_numbers<[1], [0], [0], [1], [0, 0, 1, 1], [], []>} : vector<8x128xf32>, vector<128x128xf32>, vector<8x128xf32> -> vector<8x128xf32>
    %c0_78 = arith.constant 0 : index
    %c0_79 = arith.constant 0 : index
    %177 = vector.load %arg10[%c0_78, %c0_79] : memref<8x128xf32, #tpu.memory_space<vmem>>, vector<8x128xf32>
    %178 = arith.addf %176, %177 : vector<8x128xf32>
    %cst_80 = arith.constant dense<0.000000e+00> : vector<8xf32>
    %179 = vector.multi_reduction <add>, %178, %cst_80 [1] : vector<8x128xf32> to vector<8xf32>
    %180 = vector.shape_cast %179 : vector<8xf32> to vector<8x1xf32>
    %cst_81 = arith.constant 1.280000e+02 : f32
    %181 = vector.broadcast %cst_81 : f32 to vector<8x1xf32>
    %182 = arith.divf %180, %181 : vector<8x1xf32>
    %183 = arith.mulf %178, %178 : vector<8x128xf32>
    %cst_82 = arith.constant dense<0.000000e+00> : vector<8xf32>
    %184 = vector.multi_reduction <add>, %183, %cst_82 [1] : vector<8x128xf32> to vector<8xf32>
    %185 = vector.shape_cast %184 : vector<8xf32> to vector<8x1xf32>
    %cst_83 = arith.constant 1.280000e+02 : f32
    %186 = vector.broadcast %cst_83 : f32 to vector<8x1xf32>
    %187 = arith.divf %185, %186 : vector<8x1xf32>
    %188 = arith.mulf %182, %182 : vector<8x1xf32>
    %189 = arith.subf %187, %188 : vector<8x1xf32>
    %cst_84 = arith.constant 0.000000e+00 : f32
    %190 = vector.broadcast %cst_84 : f32 to vector<8x1xf32>
    %191 = arith.maximumf %189, %190 : vector<8x1xf32>
    %cst_85 = arith.constant 9.99999974E-6 : f32
    %192 = vector.broadcast %cst_85 : f32 to vector<8x1xf32>
    %193 = arith.addf %191, %192 : vector<8x1xf32>
    %194 = math.rsqrt %193 : vector<8x1xf32>
    %195 = vector.broadcast %194 : vector<8x1xf32> to vector<8x128xf32>
    %196 = arith.mulf %178, %195 : vector<8x128xf32>
    %197 = arith.mulf %182, %194 : vector<8x1xf32>
    %198 = vector.broadcast %197 : vector<8x1xf32> to vector<8x128xf32>
    %199 = arith.subf %196, %198 : vector<8x128xf32>
    %200 = vector.broadcast %3 : vector<1x128xf32> to vector<8x128xf32>
    %201 = arith.mulf %199, %200 : vector<8x128xf32>
    %202 = vector.broadcast %4 : vector<1x128xf32> to vector<8x128xf32>
    %203 = arith.addf %201, %202 : vector<8x128xf32>
    %cst_86 = arith.constant 0.000000e+00 : f32
    %204 = vector.broadcast %cst_86 : f32 to vector<8x128xf32>
    %205 = arith.maximumf %203, %204 : vector<8x128xf32>
    %c0_87 = arith.constant 0 : index
    %c256_88 = arith.constant 256 : index
    %206 = vector.load %arg8[%c0_87, %c256_88] : memref<8x768xf32, #tpu.memory_space<vmem>>, vector<8x128xf32>
    tpu.vector_store %arg8[%c0_87, %c256_88], %205 {strides = array<i32>} : memref<8x768xf32, #tpu.memory_space<vmem>>, vector<8x128xf32>,
    %c0_89 = arith.constant 0 : index
    %c384 = arith.constant 384 : index
    %207 = vector.load %arg9[%c0_89, %c384] : memref<8x768xf32, #tpu.memory_space<vmem>>, vector<8x128xf32>
    %208 = vector.broadcast %0 : vector<1x128xf32> to vector<8x128xf32>
    %209 = arith.addf %207, %208 : vector<8x128xf32>
    %cst_90 = arith.constant 0.000000e+00 : f32
    %210 = vector.broadcast %cst_90 : f32 to vector<8x128xf32>
    %211 = arith.maximumf %209, %210 : vector<8x128xf32>
    %cst_91 = arith.constant dense<0.000000e+00> : vector<8x128xf32>
    %212 = tpu.matmul %211, %5, %cst_91 {dimension_numbers = #tpu.dot_dimension_numbers<[1], [0], [0], [1], [0, 0, 1, 1], [], []>} : vector<8x128xf32>, vector<128x128xf32>, vector<8x128xf32> -> vector<8x128xf32>
    %cst_92 = arith.constant dense<0.000000e+00> : vector<8xf32>
    %213 = vector.multi_reduction <add>, %212, %cst_92 [1] : vector<8x128xf32> to vector<8xf32>
    %214 = vector.shape_cast %213 : vector<8xf32> to vector<8x1xf32>
    %cst_93 = arith.constant 1.280000e+02 : f32
    %215 = vector.broadcast %cst_93 : f32 to vector<8x1xf32>
    %216 = arith.divf %214, %215 : vector<8x1xf32>
    %217 = arith.mulf %212, %212 : vector<8x128xf32>
    %cst_94 = arith.constant dense<0.000000e+00> : vector<8xf32>
    %218 = vector.multi_reduction <add>, %217, %cst_94 [1] : vector<8x128xf32> to vector<8xf32>
    %219 = vector.shape_cast %218 : vector<8xf32> to vector<8x1xf32>
    %cst_95 = arith.constant 1.280000e+02 : f32
    %220 = vector.broadcast %cst_95 : f32 to vector<8x1xf32>
    %221 = arith.divf %219, %220 : vector<8x1xf32>
    %222 = arith.mulf %216, %216 : vector<8x1xf32>
    %223 = arith.subf %221, %222 : vector<8x1xf32>
    %cst_96 = arith.constant 0.000000e+00 : f32
    %224 = vector.broadcast %cst_96 : f32 to vector<8x1xf32>
    %225 = arith.maximumf %223, %224 : vector<8x1xf32>
    %cst_97 = arith.constant 9.99999974E-6 : f32
    %226 = vector.broadcast %cst_97 : f32 to vector<8x1xf32>
    %227 = arith.addf %225, %226 : vector<8x1xf32>
    %228 = math.rsqrt %227 : vector<8x1xf32>
    %229 = vector.broadcast %228 : vector<8x1xf32> to vector<8x128xf32>
    %230 = arith.mulf %212, %229 : vector<8x128xf32>
    %231 = arith.mulf %216, %228 : vector<8x1xf32>
    %232 = vector.broadcast %231 : vector<8x1xf32> to vector<8x128xf32>
    %233 = arith.subf %230, %232 : vector<8x128xf32>
    %234 = vector.broadcast %1 : vector<1x128xf32> to vector<8x128xf32>
    %235 = arith.mulf %233, %234 : vector<8x128xf32>
    %236 = vector.broadcast %2 : vector<1x128xf32> to vector<8x128xf32>
    %237 = arith.addf %235, %236 : vector<8x128xf32>
    %cst_98 = arith.constant 0.000000e+00 : f32
    %238 = vector.broadcast %cst_98 : f32 to vector<8x128xf32>
    %239 = arith.maximumf %237, %238 : vector<8x128xf32>
    %cst_99 = arith.constant dense<0.000000e+00> : vector<8x128xf32>
    %240 = tpu.matmul %239, %6, %cst_99 {dimension_numbers = #tpu.dot_dimension_numbers<[1], [0], [0], [1], [0, 0, 1, 1], [], []>} : vector<8x128xf32>, vector<128x128xf32>, vector<8x128xf32> -> vector<8x128xf32>
    %c0_100 = arith.constant 0 : index
    %c0_101 = arith.constant 0 : index
    %241 = vector.load %arg10[%c0_100, %c0_101] : memref<8x128xf32, #tpu.memory_space<vmem>>, vector<8x128xf32>
    %242 = arith.addf %240, %241 : vector<8x128xf32>
    %cst_102 = arith.constant dense<0.000000e+00> : vector<8xf32>
    %243 = vector.multi_reduction <add>, %242, %cst_102 [1] : vector<8x128xf32> to vector<8xf32>
    %244 = vector.shape_cast %243 : vector<8xf32> to vector<8x1xf32>
    %cst_103 = arith.constant 1.280000e+02 : f32
    %245 = vector.broadcast %cst_103 : f32 to vector<8x1xf32>
    %246 = arith.divf %244, %245 : vector<8x1xf32>
    %247 = arith.mulf %242, %242 : vector<8x128xf32>
    %cst_104 = arith.constant dense<0.000000e+00> : vector<8xf32>
    %248 = vector.multi_reduction <add>, %247, %cst_104 [1] : vector<8x128xf32> to vector<8xf32>
    %249 = vector.shape_cast %248 : vector<8xf32> to vector<8x1xf32>
    %cst_105 = arith.constant 1.280000e+02 : f32
    %250 = vector.broadcast %cst_105 : f32 to vector<8x1xf32>
    %251 = arith.divf %249, %250 : vector<8x1xf32>
    %252 = arith.mulf %246, %246 : vector<8x1xf32>
    %253 = arith.subf %251, %252 : vector<8x1xf32>
    %cst_106 = arith.constant 0.000000e+00 : f32
    %254 = vector.broadcast %cst_106 : f32 to vector<8x1xf32>
    %255 = arith.maximumf %253, %254 : vector<8x1xf32>
    %cst_107 = arith.constant 9.99999974E-6 : f32
    %256 = vector.broadcast %cst_107 : f32 to vector<8x1xf32>
    %257 = arith.addf %255, %256 : vector<8x1xf32>
    %258 = math.rsqrt %257 : vector<8x1xf32>
    %259 = vector.broadcast %258 : vector<8x1xf32> to vector<8x128xf32>
    %260 = arith.mulf %242, %259 : vector<8x128xf32>
    %261 = arith.mulf %246, %258 : vector<8x1xf32>
    %262 = vector.broadcast %261 : vector<8x1xf32> to vector<8x128xf32>
    %263 = arith.subf %260, %262 : vector<8x128xf32>
    %264 = vector.broadcast %3 : vector<1x128xf32> to vector<8x128xf32>
    %265 = arith.mulf %263, %264 : vector<8x128xf32>
    %266 = vector.broadcast %4 : vector<1x128xf32> to vector<8x128xf32>
    %267 = arith.addf %265, %266 : vector<8x128xf32>
    %cst_108 = arith.constant 0.000000e+00 : f32
    %268 = vector.broadcast %cst_108 : f32 to vector<8x128xf32>
    %269 = arith.maximumf %267, %268 : vector<8x128xf32>
    %c0_109 = arith.constant 0 : index
    %c384_110 = arith.constant 384 : index
    %270 = vector.load %arg8[%c0_109, %c384_110] : memref<8x768xf32, #tpu.memory_space<vmem>>, vector<8x128xf32>
    tpu.vector_store %arg8[%c0_109, %c384_110], %269 {strides = array<i32>} : memref<8x768xf32, #tpu.memory_space<vmem>>, vector<8x128xf32>,
    %c0_111 = arith.constant 0 : index
    %c512 = arith.constant 512 : index
    %271 = vector.load %arg9[%c0_111, %c512] : memref<8x768xf32, #tpu.memory_space<vmem>>, vector<8x128xf32>
    %272 = vector.broadcast %0 : vector<1x128xf32> to vector<8x128xf32>
    %273 = arith.addf %271, %272 : vector<8x128xf32>
    %cst_112 = arith.constant 0.000000e+00 : f32
    %274 = vector.broadcast %cst_112 : f32 to vector<8x128xf32>
    %275 = arith.maximumf %273, %274 : vector<8x128xf32>
    %cst_113 = arith.constant dense<0.000000e+00> : vector<8x128xf32>
    %276 = tpu.matmul %275, %5, %cst_113 {dimension_numbers = #tpu.dot_dimension_numbers<[1], [0], [0], [1], [0, 0, 1, 1], [], []>} : vector<8x128xf32>, vector<128x128xf32>, vector<8x128xf32> -> vector<8x128xf32>
    %cst_114 = arith.constant dense<0.000000e+00> : vector<8xf32>
    %277 = vector.multi_reduction <add>, %276, %cst_114 [1] : vector<8x128xf32> to vector<8xf32>
    %278 = vector.shape_cast %277 : vector<8xf32> to vector<8x1xf32>
    %cst_115 = arith.constant 1.280000e+02 : f32
    %279 = vector.broadcast %cst_115 : f32 to vector<8x1xf32>
    %280 = arith.divf %278, %279 : vector<8x1xf32>
    %281 = arith.mulf %276, %276 : vector<8x128xf32>
    %cst_116 = arith.constant dense<0.000000e+00> : vector<8xf32>
    %282 = vector.multi_reduction <add>, %281, %cst_116 [1] : vector<8x128xf32> to vector<8xf32>
    %283 = vector.shape_cast %282 : vector<8xf32> to vector<8x1xf32>
    %cst_117 = arith.constant 1.280000e+02 : f32
    %284 = vector.broadcast %cst_117 : f32 to vector<8x1xf32>
    %285 = arith.divf %283, %284 : vector<8x1xf32>
    %286 = arith.mulf %280, %280 : vector<8x1xf32>
    %287 = arith.subf %285, %286 : vector<8x1xf32>
    %cst_118 = arith.constant 0.000000e+00 : f32
    %288 = vector.broadcast %cst_118 : f32 to vector<8x1xf32>
    %289 = arith.maximumf %287, %288 : vector<8x1xf32>
    %cst_119 = arith.constant 9.99999974E-6 : f32
    %290 = vector.broadcast %cst_119 : f32 to vector<8x1xf32>
    %291 = arith.addf %289, %290 : vector<8x1xf32>
    %292 = math.rsqrt %291 : vector<8x1xf32>
    %293 = vector.broadcast %292 : vector<8x1xf32> to vector<8x128xf32>
    %294 = arith.mulf %276, %293 : vector<8x128xf32>
    %295 = arith.mulf %280, %292 : vector<8x1xf32>
    %296 = vector.broadcast %295 : vector<8x1xf32> to vector<8x128xf32>
    %297 = arith.subf %294, %296 : vector<8x128xf32>
    %298 = vector.broadcast %1 : vector<1x128xf32> to vector<8x128xf32>
    %299 = arith.mulf %297, %298 : vector<8x128xf32>
    %300 = vector.broadcast %2 : vector<1x128xf32> to vector<8x128xf32>
    %301 = arith.addf %299, %300 : vector<8x128xf32>
    %cst_120 = arith.constant 0.000000e+00 : f32
    %302 = vector.broadcast %cst_120 : f32 to vector<8x128xf32>
    %303 = arith.maximumf %301, %302 : vector<8x128xf32>
    %cst_121 = arith.constant dense<0.000000e+00> : vector<8x128xf32>
    %304 = tpu.matmul %303, %6, %cst_121 {dimension_numbers = #tpu.dot_dimension_numbers<[1], [0], [0], [1], [0, 0, 1, 1], [], []>} : vector<8x128xf32>, vector<128x128xf32>, vector<8x128xf32> -> vector<8x128xf32>
    %c0_122 = arith.constant 0 : index
    %c0_123 = arith.constant 0 : index
    %305 = vector.load %arg10[%c0_122, %c0_123] : memref<8x128xf32, #tpu.memory_space<vmem>>, vector<8x128xf32>
    %306 = arith.addf %304, %305 : vector<8x128xf32>
    %cst_124 = arith.constant dense<0.000000e+00> : vector<8xf32>
    %307 = vector.multi_reduction <add>, %306, %cst_124 [1] : vector<8x128xf32> to vector<8xf32>
    %308 = vector.shape_cast %307 : vector<8xf32> to vector<8x1xf32>
    %cst_125 = arith.constant 1.280000e+02 : f32
    %309 = vector.broadcast %cst_125 : f32 to vector<8x1xf32>
    %310 = arith.divf %308, %309 : vector<8x1xf32>
    %311 = arith.mulf %306, %306 : vector<8x128xf32>
    %cst_126 = arith.constant dense<0.000000e+00> : vector<8xf32>
    %312 = vector.multi_reduction <add>, %311, %cst_126 [1] : vector<8x128xf32> to vector<8xf32>
    %313 = vector.shape_cast %312 : vector<8xf32> to vector<8x1xf32>
    %cst_127 = arith.constant 1.280000e+02 : f32
    %314 = vector.broadcast %cst_127 : f32 to vector<8x1xf32>
    %315 = arith.divf %313, %314 : vector<8x1xf32>
    %316 = arith.mulf %310, %310 : vector<8x1xf32>
    %317 = arith.subf %315, %316 : vector<8x1xf32>
    %cst_128 = arith.constant 0.000000e+00 : f32
    %318 = vector.broadcast %cst_128 : f32 to vector<8x1xf32>
    %319 = arith.maximumf %317, %318 : vector<8x1xf32>
    %cst_129 = arith.constant 9.99999974E-6 : f32
    %320 = vector.broadcast %cst_129 : f32 to vector<8x1xf32>
    %321 = arith.addf %319, %320 : vector<8x1xf32>
    %322 = math.rsqrt %321 : vector<8x1xf32>
    %323 = vector.broadcast %322 : vector<8x1xf32> to vector<8x128xf32>
    %324 = arith.mulf %306, %323 : vector<8x128xf32>
    %325 = arith.mulf %310, %322 : vector<8x1xf32>
    %326 = vector.broadcast %325 : vector<8x1xf32> to vector<8x128xf32>
    %327 = arith.subf %324, %326 : vector<8x128xf32>
    %328 = vector.broadcast %3 : vector<1x128xf32> to vector<8x128xf32>
    %329 = arith.mulf %327, %328 : vector<8x128xf32>
    %330 = vector.broadcast %4 : vector<1x128xf32> to vector<8x128xf32>
    %331 = arith.addf %329, %330 : vector<8x128xf32>
    %cst_130 = arith.constant 0.000000e+00 : f32
    %332 = vector.broadcast %cst_130 : f32 to vector<8x128xf32>
    %333 = arith.maximumf %331, %332 : vector<8x128xf32>
    %c0_131 = arith.constant 0 : index
    %c512_132 = arith.constant 512 : index
    %334 = vector.load %arg8[%c0_131, %c512_132] : memref<8x768xf32, #tpu.memory_space<vmem>>, vector<8x128xf32>
    tpu.vector_store %arg8[%c0_131, %c512_132], %333 {strides = array<i32>} : memref<8x768xf32, #tpu.memory_space<vmem>>, vector<8x128xf32>,
    %c0_133 = arith.constant 0 : index
    %c640 = arith.constant 640 : index
    %335 = vector.load %arg9[%c0_133, %c640] : memref<8x768xf32, #tpu.memory_space<vmem>>, vector<8x128xf32>
    %336 = vector.broadcast %0 : vector<1x128xf32> to vector<8x128xf32>
    %337 = arith.addf %335, %336 : vector<8x128xf32>
    %cst_134 = arith.constant 0.000000e+00 : f32
    %338 = vector.broadcast %cst_134 : f32 to vector<8x128xf32>
    %339 = arith.maximumf %337, %338 : vector<8x128xf32>
    %cst_135 = arith.constant dense<0.000000e+00> : vector<8x128xf32>
    %340 = tpu.matmul %339, %5, %cst_135 {dimension_numbers = #tpu.dot_dimension_numbers<[1], [0], [0], [1], [0, 0, 1, 1], [], []>} : vector<8x128xf32>, vector<128x128xf32>, vector<8x128xf32> -> vector<8x128xf32>
    %cst_136 = arith.constant dense<0.000000e+00> : vector<8xf32>
    %341 = vector.multi_reduction <add>, %340, %cst_136 [1] : vector<8x128xf32> to vector<8xf32>
    %342 = vector.shape_cast %341 : vector<8xf32> to vector<8x1xf32>
    %cst_137 = arith.constant 1.280000e+02 : f32
    %343 = vector.broadcast %cst_137 : f32 to vector<8x1xf32>
    %344 = arith.divf %342, %343 : vector<8x1xf32>
    %345 = arith.mulf %340, %340 : vector<8x128xf32>
    %cst_138 = arith.constant dense<0.000000e+00> : vector<8xf32>
    %346 = vector.multi_reduction <add>, %345, %cst_138 [1] : vector<8x128xf32> to vector<8xf32>
    %347 = vector.shape_cast %346 : vector<8xf32> to vector<8x1xf32>
    %cst_139 = arith.constant 1.280000e+02 : f32
    %348 = vector.broadcast %cst_139 : f32 to vector<8x1xf32>
    %349 = arith.divf %347, %348 : vector<8x1xf32>
    %350 = arith.mulf %344, %344 : vector<8x1xf32>
    %351 = arith.subf %349, %350 : vector<8x1xf32>
    %cst_140 = arith.constant 0.000000e+00 : f32
    %352 = vector.broadcast %cst_140 : f32 to vector<8x1xf32>
    %353 = arith.maximumf %351, %352 : vector<8x1xf32>
    %cst_141 = arith.constant 9.99999974E-6 : f32
    %354 = vector.broadcast %cst_141 : f32 to vector<8x1xf32>
    %355 = arith.addf %353, %354 : vector<8x1xf32>
    %356 = math.rsqrt %355 : vector<8x1xf32>
    %357 = vector.broadcast %356 : vector<8x1xf32> to vector<8x128xf32>
    %358 = arith.mulf %340, %357 : vector<8x128xf32>
    %359 = arith.mulf %344, %356 : vector<8x1xf32>
    %360 = vector.broadcast %359 : vector<8x1xf32> to vector<8x128xf32>
    %361 = arith.subf %358, %360 : vector<8x128xf32>
    %362 = vector.broadcast %1 : vector<1x128xf32> to vector<8x128xf32>
    %363 = arith.mulf %361, %362 : vector<8x128xf32>
    %364 = vector.broadcast %2 : vector<1x128xf32> to vector<8x128xf32>
    %365 = arith.addf %363, %364 : vector<8x128xf32>
    %cst_142 = arith.constant 0.000000e+00 : f32
    %366 = vector.broadcast %cst_142 : f32 to vector<8x128xf32>
    %367 = arith.maximumf %365, %366 : vector<8x128xf32>
    %cst_143 = arith.constant dense<0.000000e+00> : vector<8x128xf32>
    %368 = tpu.matmul %367, %6, %cst_143 {dimension_numbers = #tpu.dot_dimension_numbers<[1], [0], [0], [1], [0, 0, 1, 1], [], []>} : vector<8x128xf32>, vector<128x128xf32>, vector<8x128xf32> -> vector<8x128xf32>
    %c0_144 = arith.constant 0 : index
    %c0_145 = arith.constant 0 : index
    %369 = vector.load %arg10[%c0_144, %c0_145] : memref<8x128xf32, #tpu.memory_space<vmem>>, vector<8x128xf32>
    %370 = arith.addf %368, %369 : vector<8x128xf32>
    %cst_146 = arith.constant dense<0.000000e+00> : vector<8xf32>
    %371 = vector.multi_reduction <add>, %370, %cst_146 [1] : vector<8x128xf32> to vector<8xf32>
    %372 = vector.shape_cast %371 : vector<8xf32> to vector<8x1xf32>
    %cst_147 = arith.constant 1.280000e+02 : f32
    %373 = vector.broadcast %cst_147 : f32 to vector<8x1xf32>
    %374 = arith.divf %372, %373 : vector<8x1xf32>
    %375 = arith.mulf %370, %370 : vector<8x128xf32>
    %cst_148 = arith.constant dense<0.000000e+00> : vector<8xf32>
    %376 = vector.multi_reduction <add>, %375, %cst_148 [1] : vector<8x128xf32> to vector<8xf32>
    %377 = vector.shape_cast %376 : vector<8xf32> to vector<8x1xf32>
    %cst_149 = arith.constant 1.280000e+02 : f32
    %378 = vector.broadcast %cst_149 : f32 to vector<8x1xf32>
    %379 = arith.divf %377, %378 : vector<8x1xf32>
    %380 = arith.mulf %374, %374 : vector<8x1xf32>
    %381 = arith.subf %379, %380 : vector<8x1xf32>
    %cst_150 = arith.constant 0.000000e+00 : f32
    %382 = vector.broadcast %cst_150 : f32 to vector<8x1xf32>
    %383 = arith.maximumf %381, %382 : vector<8x1xf32>
    %cst_151 = arith.constant 9.99999974E-6 : f32
    %384 = vector.broadcast %cst_151 : f32 to vector<8x1xf32>
    %385 = arith.addf %383, %384 : vector<8x1xf32>
    %386 = math.rsqrt %385 : vector<8x1xf32>
    %387 = vector.broadcast %386 : vector<8x1xf32> to vector<8x128xf32>
    %388 = arith.mulf %370, %387 : vector<8x128xf32>
    %389 = arith.mulf %374, %386 : vector<8x1xf32>
    %390 = vector.broadcast %389 : vector<8x1xf32> to vector<8x128xf32>
    %391 = arith.subf %388, %390 : vector<8x128xf32>
    %392 = vector.broadcast %3 : vector<1x128xf32> to vector<8x128xf32>
    %393 = arith.mulf %391, %392 : vector<8x128xf32>
    %394 = vector.broadcast %4 : vector<1x128xf32> to vector<8x128xf32>
    %395 = arith.addf %393, %394 : vector<8x128xf32>
    %cst_152 = arith.constant 0.000000e+00 : f32
    %396 = vector.broadcast %cst_152 : f32 to vector<8x128xf32>
    %397 = arith.maximumf %395, %396 : vector<8x128xf32>
    %c0_153 = arith.constant 0 : index
    %c640_154 = arith.constant 640 : index
    %398 = vector.load %arg8[%c0_153, %c640_154] : memref<8x768xf32, #tpu.memory_space<vmem>>, vector<8x128xf32>
    tpu.vector_store %arg8[%c0_153, %c640_154], %397 {strides = array<i32>} : memref<8x768xf32, #tpu.memory_space<vmem>>, vector<8x128xf32>,
    return
  }
  func.func @transform_0(%arg0: i32) -> (i32, i32) {
    %c0_i32 = arith.constant 0 : i32
    %c0_i32_0 = arith.constant 0 : i32
    return %arg0, %c0_i32 : i32, i32
  }
  func.func @transform_1(%arg0: i32) -> (i32, i32) {
    %c0_i32 = arith.constant 0 : i32
    %c0_i32_0 = arith.constant 0 : i32
    return %arg0, %c0_i32 : i32, i32
  }
  func.func @transform_2(%arg0: i32) -> (i32, i32) {
    %c0_i32 = arith.constant 0 : i32
    %c0_i32_0 = arith.constant 0 : i32
    %c0_i32_1 = arith.constant 0 : i32
    return %c0_i32, %c0_i32_0 : i32, i32
  }
  func.func @transform_3(%arg0: i32) -> (i32, i32) {
    %c0_i32 = arith.constant 0 : i32
    %c0_i32_0 = arith.constant 0 : i32
    %c0_i32_1 = arith.constant 0 : i32
    return %c0_i32, %c0_i32_0 : i32, i32
  }
  func.func @transform_4(%arg0: i32) -> (i32, i32) {
    %c0_i32 = arith.constant 0 : i32
    %c0_i32_0 = arith.constant 0 : i32
    %c0_i32_1 = arith.constant 0 : i32
    return %c0_i32, %c0_i32_0 : i32, i32
  }
  func.func @transform_5(%arg0: i32) -> (i32, i32) {
    %c0_i32 = arith.constant 0 : i32
    %c0_i32_0 = arith.constant 0 : i32
    %c0_i32_1 = arith.constant 0 : i32
    return %c0_i32, %c0_i32_0 : i32, i32
  }
  func.func @transform_6(%arg0: i32) -> (i32, i32) {
    %c0_i32 = arith.constant 0 : i32
    %c0_i32_0 = arith.constant 0 : i32
    %c0_i32_1 = arith.constant 0 : i32
    return %c0_i32, %c0_i32_0 : i32, i32
  }
  func.func @transform_7(%arg0: i32) -> (i32, i32) {
    %c0_i32 = arith.constant 0 : i32
    %c0_i32_0 = arith.constant 0 : i32
    return %arg0, %c0_i32 : i32, i32
  }
}

</mosaic_0001>

<llo_original>
// kernel: att_dest.1
$region0: #{att_dest.1}
  #allocation0 [shape = 'u32[]', space=smem, size = 0x4, offset = 0x4, fixed_abs, tag = 'smem constant byte address 0x4 - core index']
  #allocation1 [shape = 'u32[144,128]{1,0:T(1,128)}', space=vmem, size = 0x12000, scoped, tag = 'internal scratch']
  #allocation2 [shape = 'f32[8,768]{1,0:T(8,128)}', space=vmem, size = 0x6000, scoped, tag = 'scratch operand']
  #allocation3 [shape = 'f32[8,128]{1,0:T(8,128)}', space=vmem, size = 0x1000, scoped, tag = 'scratch operand']
  %s0 = inlined_call_operand.vmem [shape: f32[4,12], index: 0, kind: input, shape index: {}]
  %s1 = inlined_call_operand.vmem [shape: f32[4,128], index: 1, kind: input, shape index: {}]
  %s2 = inlined_call_operand.vmem [shape: f32[12,768], index: 2, kind: input, shape index: {}]
  %s3 = inlined_call_operand.vmem [shape: f32[5,128], index: 3, kind: input, shape index: {}]
  %s4 = inlined_call_operand.vmem [shape: f32[128,128], index: 4, kind: input, shape index: {}]
  %s5 = inlined_call_operand.vmem [shape: f32[128,128], index: 5, kind: input, shape index: {}]
  %s6 = inlined_call_operand.vmem [shape: f32[128,128], index: 6, kind: input, shape index: {}]
  %s7 = inlined_call_operand.vmem [shape: f32[4,768], index: 7, kind: output, shape index: {}]
  %s8 = sld [smem:[#allocation0]]
  $region57: #{att_dest.1} parent=0
    _
  %s10 = ssub.s32 1, %s8
  %s11 = scalar_select 0, %s10, %s8
  $region1: #{att_dest.1} parent=0
    #allocation4 [shape = 'u8[24576]{0}', space=vmem, size = 0x6000, scoped, tag = 'output window, operand 0, single buffered']
    // Predicated region
    $region2: #{att_dest.1} parent=1 // pred_check
      _
    $region3: #{att_dest.1} parent=1 // pred_check_branch
      %13 = sbr.rel (0) target = $region5
    $region4: #{att_dest.1} parent=1 // pred_region
      _
    $region5: #{att_dest.1} parent=1 // pred_fallthru
      _
    // Predicated region
    $region6: #{att_dest.1} parent=1 // pred_check
      _
    $region7: #{att_dest.1} parent=1 // pred_check_branch
      %15 = sbr.rel (0) target = $region9
    $region8: #{att_dest.1} parent=1 // pred_region
      _
    $region9: #{att_dest.1} parent=1 // pred_fallthru
      _
    // Predicated region
    $region10: #{att_dest.1} parent=1 // pred_check
      _
    $region11: #{att_dest.1} parent=1 // pred_check_branch
      %17 = sbr.rel (0) target = $region13
    $region12: #{att_dest.1} parent=1 // pred_region
      _
    $region13: #{att_dest.1} parent=1 // pred_fallthru
      _
    // Predicated region
    $region14: #{att_dest.1} parent=1 // pred_check
      _
    $region15: #{att_dest.1} parent=1 // pred_check_branch
      %19 = sbr.rel (0) target = $region17
    $region16: #{att_dest.1} parent=1 // pred_region
      _
    $region17: #{att_dest.1} parent=1 // pred_fallthru
      _
    // Predicated region
    $region18: #{att_dest.1} parent=1 // pred_check
      _
    $region19: #{att_dest.1} parent=1 // pred_check_branch
      %21 = sbr.rel (0) target = $region21
    $region20: #{att_dest.1} parent=1 // pred_region
      _
    $region21: #{att_dest.1} parent=1 // pred_fallthru
      _
    // Predicated region
    $region22: #{att_dest.1} parent=1 // pred_check
      _
    $region23: #{att_dest.1} parent=1 // pred_check_branch
      %23 = sbr.rel (0) target = $region25
    $region24: #{att_dest.1} parent=1 // pred_region
      _
    $region25: #{att_dest.1} parent=1 // pred_fallthru
      _
    // Predicated region
    $region26: #{att_dest.1} parent=1 // pred_check
      _
    $region27: #{att_dest.1} parent=1 // pred_check_branch
      %25 = sbr.rel (0) target = $region29
    $region28: #{att_dest.1} parent=1 // pred_region
      _
    $region29: #{att_dest.1} parent=1 // pred_fallthru
      _
    %v26 = vld [vmem:[%s3] sm:$0x1]
    %v27 = vld [vmem:[%s3 + $0x1] sm:$0x1]
    %v28 = vld [vmem:[%s3 + $0x2] sm:$0x1]
    %v29 = vld [vmem:[%s3 + $0x3] sm:$0x1]
    %v30 = vld [vmem:[%s3 + $0x4] sm:$0x1]
    %v31 = vld [vmem:[%s4] sm:$0xff]
    %v32 = vld [vmem:[%s4 + $0x8] sm:$0xff]
    %v33 = vld [vmem:[%s4 + $0x10] sm:$0xff]
    %v34 = vld [vmem:[%s4 + $0x18] sm:$0xff]
    %v35 = vld [vmem:[%s4 + $0x20] sm:$0xff]
    %v36 = vld [vmem:[%s4 + $0x28] sm:$0xff]
    %v37 = vld [vmem:[%s4 + $0x30] sm:$0xff]
    %v38 = vld [vmem:[%s4 + $0x38] sm:$0xff]
    %v39 = vld [vmem:[%s4 + $0x40] sm:$0xff]
    %v40 = vld [vmem:[%s4 + $0x48] sm:$0xff]
    %v41 = vld [vmem:[%s4 + $0x50] sm:$0xff]
    %v42 = vld [vmem:[%s4 + $0x58] sm:$0xff]
    %v43 = vld [vmem:[%s4 + $0x60] sm:$0xff]
    %v44 = vld [vmem:[%s4 + $0x68] sm:$0xff]
    %v45 = vld [vmem:[%s4 + $0x70] sm:$0xff]
    %v46 = vld [vmem:[%s4 + $0x78] sm:$0xff]
    %v47 = vld [vmem:[%s5] sm:$0xff]
    %v48 = vld [vmem:[%s5 + $0x8] sm:$0xff]
    %v49 = vld [vmem:[%s5 + $0x10] sm:$0xff]
    %v50 = vld [vmem:[%s5 + $0x18] sm:$0xff]
    %v51 = vld [vmem:[%s5 + $0x20] sm:$0xff]
    %v52 = vld [vmem:[%s5 + $0x28] sm:$0xff]
    %v53 = vld [vmem:[%s5 + $0x30] sm:$0xff]
    %v54 = vld [vmem:[%s5 + $0x38] sm:$0xff]
    %v55 = vld [vmem:[%s5 + $0x40] sm:$0xff]
    %v56 = vld [vmem:[%s5 + $0x48] sm:$0xff]
    %v57 = vld [vmem:[%s5 + $0x50] sm:$0xff]
    %v58 = vld [vmem:[%s5 + $0x58] sm:$0xff]
    %v59 = vld [vmem:[%s5 + $0x60] sm:$0xff]
    %v60 = vld [vmem:[%s5 + $0x68] sm:$0xff]
    %v61 = vld [vmem:[%s5 + $0x70] sm:$0xff]
    %v62 = vld [vmem:[%s5 + $0x78] sm:$0xff]
    %v63 = vld [vmem:[%s0] sm:$0xff]
    %v64 = vld [vmem:[%s2] sm:$0xff]
    %v65 = vld [vmem:[%s2 + $0x8] sm:$0xff]
    %v66 = vld [vmem:[%s2 + $0x10] sm:$0xff]
    %v67 = vld [vmem:[%s2 + $0x18] sm:$0xff]
    %v68 = vld [vmem:[%s2 + $0x20] sm:$0xff]
    %v69 = vld [vmem:[%s2 + $0x28] sm:$0xff]
    %v70 = vld [vmem:[%s2 + $0x30] sm:$0xf]
    %v71 = vld [vmem:[%s2 + $0x38] sm:$0xf]
    %v72 = vld [vmem:[%s2 + $0x40] sm:$0xf]
    %v73 = vld [vmem:[%s2 + $0x48] sm:$0xf]
    %v74 = vld [vmem:[%s2 + $0x50] sm:$0xf]
    %v75 = vld [vmem:[%s2 + $0x58] sm:$0xf]
    %vm76 = vcmask 97280
    %v78 = vsel %vm76, %v63, 0
    %vm80 = vcmask 1043456
    %v82 = vsel %vm80, %v70, 0
    %v85 = vsel %vm80, %v71, 0
    %v88 = vsel %vm80, %v72, 0
    %v91 = vsel %vm80, %v73, 0
    %v94 = vsel %vm80, %v74, 0
    %v97 = vsel %vm80, %v75, 0
    %99 = vmatprep.subr.mxu0 0.0
    %100 = vmatpush1.msra.mxu0 0.0
    %101 = vmatprep.subr.mxu0 0.0
    %102 = vmatpush1.msra.mxu0 0.0
    %103 = vmatprep.subr.mxu0 0.0
    %104 = vmatpush1.msra.mxu0 0.0
    %105 = vmatprep.subr.mxu0 0.0
    %106 = vmatpush1.msra.mxu0 0.0
    %107 = vmatprep.subr.mxu0 0.0
    %108 = vmatpush1.msra.mxu0 0.0
    %109 = vmatprep.subr.mxu0 0.0
    %110 = vmatpush1.msra.mxu0 0.0
    %111 = vmatprep.subr.mxu0 0.0
    %112 = vmatpush1.msra.mxu0 0.0
    %113 = vmatprep.subr.mxu0 0.0
    %114 = vmatpush1.msra.mxu0 0.0
    %115 = vmatprep.subr.mxu0 0.0
    %116 = vmatpush1.msra.mxu0 0.0
    %117 = vmatprep.subr.mxu0 0.0
    %118 = vmatpush1.msra.mxu0 0.0
    %119 = vmatprep.subr.mxu0 0.0
    %120 = vmatpush1.msra.mxu0 0.0
    %121 = vmatprep.subr.mxu0 0.0
    %122 = vmatpush1.msra.mxu0 0.0
    %123 = vmatprep.subr.mxu0 0.0
    %124 = vmatpush1.msra.mxu0 0.0
    %125 = vmatprep.subr.mxu0 0.0
    %126 = vmatpush1.msra.mxu0 0.0
    %127 = vmatprep.subr.mxu0 %v85
    %128 = vmatpush1.msra.mxu0 %v82
    %129 = vmatprep.subr.mxu0 %v65
    %130 = vmatpush1.msra.mxu0 %v64
    %131 = vmatprep.subr.mxu0 0.0
    %132 = vmatpush2.msra.mxu0 0.0
    %133 = vmatprep.subr.mxu0 0.0
    %134 = vmatpush2.msra.mxu0 0.0
    %135 = vmatprep.subr.mxu0 0.0
    %136 = vmatpush2.msra.mxu0 0.0
    %137 = vmatprep.subr.mxu0 0.0
    %138 = vmatpush2.msra.mxu0 0.0
    %139 = vmatprep.subr.mxu0 0.0
    %140 = vmatpush2.msra.mxu0 0.0
    %141 = vmatprep.subr.mxu0 0.0
    %142 = vmatpush2.msra.mxu0 0.0
    %143 = vmatprep.subr.mxu0 0.0
    %144 = vmatpush2.msra.mxu0 0.0
    %145 = vmatprep.subr.mxu0 0.0
    %146 = vmatpush2.msra.mxu0 0.0
    %147 = vmatprep.subr.mxu0 0.0
    %148 = vmatpush2.msra.mxu0 0.0
    %149 = vmatprep.subr.mxu0 0.0
    %150 = vmatpush2.msra.mxu0 0.0
    %151 = vmatprep.subr.mxu0 0.0
    %152 = vmatpush2.msra.mxu0 0.0
    %153 = vmatprep.subr.mxu0 0.0
    %154 = vmatpush2.msra.mxu0 0.0
    %155 = vmatprep.subr.mxu0 0.0
    %156 = vmatpush2.msra.mxu0 0.0
    %157 = vmatprep.subr.mxu0 0.0
    %158 = vmatpush2.msra.mxu0 0.0
    %159 = vmatprep.subr.mxu0 0.0
    %160 = vmatpush2.msra.mxu0 0.0
    %161 = vmatprep.subr.mxu0 0.0
    %162 = vmatpush2.msra.mxu0 0.0
    %163 = vmatprep.mubr.f32.mxu0 0.0
    %164 = vmatmul.mubr.f32.gmra.mxu0 %v78
    %v165 = vpop.f32.mrf.mxu0
    %v166 = vadd.f32 0.0, %v165
    %v167 = vpop.f32.mrf.mxu0
    %v168 = vadd.f32 0.0, %v167
    %169 = vdwg.mxu0
    %170 = vmatprep.subr.mxu0 0.0
    %171 = vmatpush1.msra.mxu0 0.0
    %172 = vmatprep.subr.mxu0 0.0
    %173 = vmatpush1.msra.mxu0 0.0
    %174 = vmatprep.subr.mxu0 0.0
    %175 = vmatpush1.msra.mxu0 0.0
    %176 = vmatprep.subr.mxu0 0.0
    %177 = vmatpush1.msra.mxu0 0.0
    %178 = vmatprep.subr.mxu0 0.0
    %179 = vmatpush1.msra.mxu0 0.0
    %180 = vmatprep.subr.mxu0 0.0
    %181 = vmatpush1.msra.mxu0 0.0
    %182 = vmatprep.subr.mxu0 0.0
    %183 = vmatpush1.msra.mxu0 0.0
    %184 = vmatprep.subr.mxu0 0.0
    %185 = vmatpush1.msra.mxu0 0.0
    %186 = vmatprep.subr.mxu0 0.0
    %187 = vmatpush1.msra.mxu0 0.0
    %188 = vmatprep.subr.mxu0 0.0
    %189 = vmatpush1.msra.mxu0 0.0
    %190 = vmatprep.subr.mxu0 0.0
    %191 = vmatpush1.msra.mxu0 0.0
    %192 = vmatprep.subr.mxu0 0.0
    %193 = vmatpush1.msra.mxu0 0.0
    %194 = vmatprep.subr.mxu0 0.0
    %195 = vmatpush1.msra.mxu0 0.0
    %196 = vmatprep.subr.mxu0 0.0
    %197 = vmatpush1.msra.mxu0 0.0
    %198 = vmatprep.subr.mxu0 %v91
    %199 = vmatpush1.msra.mxu0 %v88
    %200 = vmatprep.subr.mxu0 %v67
    %201 = vmatpush1.msra.mxu0 %v66
    %202 = vmatprep.subr.mxu0 0.0
    %203 = vmatpush2.msra.mxu0 0.0
    %204 = vmatprep.subr.mxu0 0.0
    %205 = vmatpush2.msra.mxu0 0.0
    %206 = vmatprep.subr.mxu0 0.0
    %207 = vmatpush2.msra.mxu0 0.0
    %208 = vmatprep.subr.mxu0 0.0
    %209 = vmatpush2.msra.mxu0 0.0
    %210 = vmatprep.subr.mxu0 0.0
    %211 = vmatpush2.msra.mxu0 0.0
    %212 = vmatprep.subr.mxu0 0.0
    %213 = vmatpush2.msra.mxu0 0.0
    %214 = vmatprep.subr.mxu0 0.0
    %215 = vmatpush2.msra.mxu0 0.0
    %216 = vmatprep.subr.mxu0 0.0
    %217 = vmatpush2.msra.mxu0 0.0
    %218 = vmatprep.subr.mxu0 0.0
    %219 = vmatpush2.msra.mxu0 0.0
    %220 = vmatprep.subr.mxu0 0.0
    %221 = vmatpush2.msra.mxu0 0.0
    %222 = vmatprep.subr.mxu0 0.0
    %223 = vmatpush2.msra.mxu0 0.0
    %224 = vmatprep.subr.mxu0 0.0
    %225 = vmatpush2.msra.mxu0 0.0
    %226 = vmatprep.subr.mxu0 0.0
    %227 = vmatpush2.msra.mxu0 0.0
    %228 = vmatprep.subr.mxu0 0.0
    %229 = vmatpush2.msra.mxu0 0.0
    %230 = vmatprep.subr.mxu0 0.0
    %231 = vmatpush2.msra.mxu0 0.0
    %232 = vmatprep.subr.mxu0 0.0
    %233 = vmatpush2.msra.mxu0 0.0
    %234 = vmatprep.mubr.f32.mxu0 0.0
    %235 = vmatmul.mubr.f32.gmra.mxu0 %v78
    %v236 = vpop.f32.mrf.mxu0
    %v237 = vadd.f32 0.0, %v236
    %v238 = vpop.f32.mrf.mxu0
    %v239 = vadd.f32 0.0, %v238
    %240 = vdwg.mxu0
    %241 = vmatprep.subr.mxu0 0.0
    %242 = vmatpush1.msra.mxu0 0.0
    %243 = vmatprep.subr.mxu0 0.0
    %244 = vmatpush1.msra.mxu0 0.0
    %245 = vmatprep.subr.mxu0 0.0
    %246 = vmatpush1.msra.mxu0 0.0
    %247 = vmatprep.subr.mxu0 0.0
    %248 = vmatpush1.msra.mxu0 0.0
    %249 = vmatprep.subr.mxu0 0.0
    %250 = vmatpush1.msra.mxu0 0.0
    %251 = vmatprep.subr.mxu0 0.0
    %252 = vmatpush1.msra.mxu0 0.0
    %253 = vmatprep.subr.mxu0 0.0
    %254 = vmatpush1.msra.mxu0 0.0
    %255 = vmatprep.subr.mxu0 0.0
    %256 = vmatpush1.msra.mxu0 0.0
    %257 = vmatprep.subr.mxu0 0.0
    %258 = vmatpush1.msra.mxu0 0.0
    %259 = vmatprep.subr.mxu0 0.0
    %260 = vmatpush1.msra.mxu0 0.0
    %261 = vmatprep.subr.mxu0 0.0
    %262 = vmatpush1.msra.mxu0 0.0
    %263 = vmatprep.subr.mxu0 0.0
    %264 = vmatpush1.msra.mxu0 0.0
    %265 = vmatprep.subr.mxu0 0.0
    %266 = vmatpush1.msra.mxu0 0.0
    %267 = vmatprep.subr.mxu0 0.0
    %268 = vmatpush1.msra.mxu0 0.0
    %269 = vmatprep.subr.mxu0 %v97
    %270 = vmatpush1.msra.mxu0 %v94
    %271 = vmatprep.subr.mxu0 %v69
    %272 = vmatpush1.msra.mxu0 %v68
    %273 = vmatprep.subr.mxu0 0.0
    %274 = vmatpush2.msra.mxu0 0.0
    %275 = vmatprep.subr.mxu0 0.0
    %276 = vmatpush2.msra.mxu0 0.0
    %277 = vmatprep.subr.mxu0 0.0
    %278 = vmatpush2.msra.mxu0 0.0
    %279 = vmatprep.subr.mxu0 0.0
    %280 = vmatpush2.msra.mxu0 0.0
    %281 = vmatprep.subr.mxu0 0.0
    %282 = vmatpush2.msra.mxu0 0.0
    %283 = vmatprep.subr.mxu0 0.0
    %284 = vmatpush2.msra.mxu0 0.0
    %285 = vmatprep.subr.mxu0 0.0
    %286 = vmatpush2.msra.mxu0 0.0
    %287 = vmatprep.subr.mxu0 0.0
    %288 = vmatpush2.msra.mxu0 0.0
    %289 = vmatprep.subr.mxu0 0.0
    %290 = vmatpush2.msra.mxu0 0.0
    %291 = vmatprep.subr.mxu0 0.0
    %292 = vmatpush2.msra.mxu0 0.0
    %293 = vmatprep.subr.mxu0 0.0
    %294 = vmatpush2.msra.mxu0 0.0
    %295 = vmatprep.subr.mxu0 0.0
    %296 = vmatpush2.msra.mxu0 0.0
    %297 = vmatprep.subr.mxu0 0.0
    %298 = vmatpush2.msra.mxu0 0.0
    %299 = vmatprep.subr.mxu0 0.0
    %300 = vmatpush2.msra.mxu0 0.0
    %301 = vmatprep.subr.mxu0 0.0
    %302 = vmatpush2.msra.mxu0 0.0
    %303 = vmatprep.subr.mxu0 0.0
    %304 = vmatpush2.msra.mxu0 0.0
    %305 = vmatprep.mubr.f32.mxu0 0.0
    %306 = vmatmul.mubr.f32.gmra.mxu0 %v78
    %v307 = vpop.f32.mrf.mxu0
    %v308 = vadd.f32 0.0, %v307
    %v309 = vpop.f32.mrf.mxu0
    %v310 = vadd.f32 0.0, %v309
    %311 = vdwg.mxu0
    %312 = vst [vmem:[#allocation2] sm:$0xff] %v166
    %313 = vst [vmem:[#allocation2 + $0x8] sm:$0xff] %v168
    %314 = vst [vmem:[#allocation2 + $0x10] sm:$0xff] %v237
    %315 = vst [vmem:[#allocation2 + $0x18] sm:$0xff] %v239
    %316 = vst [vmem:[#allocation2 + $0x20] sm:$0xff] %v308
    %317 = vst [vmem:[#allocation2 + $0x28] sm:$0xff] %v310
    %v318 = vld [vmem:[%s1] sm:$0xff]
    %v319 = vld [vmem:[%s6] sm:$0xff]
    %v320 = vld [vmem:[%s6 + $0x8] sm:$0xff]
    %v321 = vld [vmem:[%s6 + $0x10] sm:$0xff]
    %v322 = vld [vmem:[%s6 + $0x18] sm:$0xff]
    %v323 = vld [vmem:[%s6 + $0x20] sm:$0xff]
    %v324 = vld [vmem:[%s6 + $0x28] sm:$0xff]
    %v325 = vld [vmem:[%s6 + $0x30] sm:$0xff]
    %v326 = vld [vmem:[%s6 + $0x38] sm:$0xff]
    %v327 = vld [vmem:[%s6 + $0x40] sm:$0xff]
    %v328 = vld [vmem:[%s6 + $0x48] sm:$0xff]
    %v329 = vld [vmem:[%s6 + $0x50] sm:$0xff]
    %v330 = vld [vmem:[%s6 + $0x58] sm:$0xff]
    %v331 = vld [vmem:[%s6 + $0x60] sm:$0xff]
    %v332 = vld [vmem:[%s6 + $0x68] sm:$0xff]
    %v333 = vld [vmem:[%s6 + $0x70] sm:$0xff]
    %v334 = vld [vmem:[%s6 + $0x78] sm:$0xff]
    %335 = vmatprep.subr.mxu0 0.0
    %336 = vmatpush1.msra.mxu0 %v334
    %337 = vmatprep.subr.mxu0 0.0
    %338 = vmatpush1.msra.mxu0 %v333
    %339 = vmatprep.subr.mxu0 0.0
    %340 = vmatpush1.msra.mxu0 %v332
    %341 = vmatprep.subr.mxu0 0.0
    %342 = vmatpush1.msra.mxu0 %v331
    %343 = vmatprep.subr.mxu0 0.0
    %344 = vmatpush1.msra.mxu0 %v330
    %345 = vmatprep.subr.mxu0 0.0
    %346 = vmatpush1.msra.mxu0 %v329
    %347 = vmatprep.subr.mxu0 0.0
    %348 = vmatpush1.msra.mxu0 %v328
    %349 = vmatprep.subr.mxu0 0.0
    %350 = vmatpush1.msra.mxu0 %v327
    %351 = vmatprep.subr.mxu0 0.0
    %352 = vmatpush1.msra.mxu0 %v326
    %353 = vmatprep.subr.mxu0 0.0
    %354 = vmatpush1.msra.mxu0 %v325
    %355 = vmatprep.subr.mxu0 0.0
    %356 = vmatpush1.msra.mxu0 %v324
    %357 = vmatprep.subr.mxu0 0.0
    %358 = vmatpush1.msra.mxu0 %v323
    %359 = vmatprep.subr.mxu0 0.0
    %360 = vmatpush1.msra.mxu0 %v322
    %361 = vmatprep.subr.mxu0 0.0
    %362 = vmatpush1.msra.mxu0 %v321
    %363 = vmatprep.subr.mxu0 0.0
    %364 = vmatpush1.msra.mxu0 %v320
    %365 = vmatprep.subr.mxu0 0.0
    %366 = vmatpush1.msra.mxu0 %v319
    %367 = vmatprep.subr.mxu0 0.0
    %368 = vmatpush2.msra.mxu0 0.0
    %369 = vmatprep.subr.mxu0 0.0
    %370 = vmatpush2.msra.mxu0 0.0
    %371 = vmatprep.subr.mxu0 0.0
    %372 = vmatpush2.msra.mxu0 0.0
    %373 = vmatprep.subr.mxu0 0.0
    %374 = vmatpush2.msra.mxu0 0.0
    %375 = vmatprep.subr.mxu0 0.0
    %376 = vmatpush2.msra.mxu0 0.0
    %377 = vmatprep.subr.mxu0 0.0
    %378 = vmatpush2.msra.mxu0 0.0
    %379 = vmatprep.subr.mxu0 0.0
    %380 = vmatpush2.msra.mxu0 0.0
    %381 = vmatprep.subr.mxu0 0.0
    %382 = vmatpush2.msra.mxu0 0.0
    %383 = vmatprep.subr.mxu0 0.0
    %384 = vmatpush2.msra.mxu0 0.0
    %385 = vmatprep.subr.mxu0 0.0
    %386 = vmatpush2.msra.mxu0 0.0
    %387 = vmatprep.subr.mxu0 0.0
    %388 = vmatpush2.msra.mxu0 0.0
    %389 = vmatprep.subr.mxu0 0.0
    %390 = vmatpush2.msra.mxu0 0.0
    %391 = vmatprep.subr.mxu0 0.0
    %392 = vmatpush2.msra.mxu0 0.0
    %393 = vmatprep.subr.mxu0 0.0
    %394 = vmatpush2.msra.mxu0 0.0
    %395 = vmatprep.subr.mxu0 0.0
    %396 = vmatpush2.msra.mxu0 0.0
    %397 = vmatprep.subr.mxu0 0.0
    %398 = vmatpush2.msra.mxu0 0.0
    %399 = vmatprep.mubr.f32.mxu0 0.0
    %400 = vmatmul.mubr.f32.gmra.mxu0 %v318
    %v401 = vpop.f32.mrf.mxu0
    %v402 = vadd.f32 0.0, %v401
    %v403 = vpop.f32.mrf.mxu0
    %404 = vdwg.mxu0
    %405 = vst [vmem:[#allocation3] sm:$0xff] %v402
    %v406 = vld [vmem:[#allocation2] sm:$0xff]
    %v407 = vlaneseq
    %v408 = vshrl.u32 %v407, 7
    %v409 = vsub.s32 0, %v408
    %v410 = vrot.slane %v26, %v409
    %v411 = vadd.f32 %v406, %v410
    %v412 = vmax.f32 %v411, 0.0
    %413 = vmatprep.subr.mxu0 0.0
    %414 = vmatpush1.msra.mxu0 %v46
    %415 = vmatprep.subr.mxu0 0.0
    %416 = vmatpush1.msra.mxu0 %v45
    %417 = vmatprep.subr.mxu0 0.0
    %418 = vmatpush1.msra.mxu0 %v44
    %419 = vmatprep.subr.mxu0 0.0
    %420 = vmatpush1.msra.mxu0 %v43
    %421 = vmatprep.subr.mxu0 0.0
    %422 = vmatpush1.msra.mxu0 %v42
    %423 = vmatprep.subr.mxu0 0.0
    %424 = vmatpush1.msra.mxu0 %v41
    %425 = vmatprep.subr.mxu0 0.0
    %426 = vmatpush1.msra.mxu0 %v40
    %427 = vmatprep.subr.mxu0 0.0
    %428 = vmatpush1.msra.mxu0 %v39
    %429 = vmatprep.subr.mxu0 0.0
    %430 = vmatpush1.msra.mxu0 %v38
    %431 = vmatprep.subr.mxu0 0.0
    %432 = vmatpush1.msra.mxu0 %v37
    %433 = vmatprep.subr.mxu0 0.0
    %434 = vmatpush1.msra.mxu0 %v36
    %435 = vmatprep.subr.mxu0 0.0
    %436 = vmatpush1.msra.mxu0 %v35
    %437 = vmatprep.subr.mxu0 0.0
    %438 = vmatpush1.msra.mxu0 %v34
    %439 = vmatprep.subr.mxu0 0.0
    %440 = vmatpush1.msra.mxu0 %v33
    %441 = vmatprep.subr.mxu0 0.0
    %442 = vmatpush1.msra.mxu0 %v32
    %443 = vmatprep.subr.mxu0 0.0
    %444 = vmatpush1.msra.mxu0 %v31
    %445 = vmatprep.subr.mxu0 0.0
    %446 = vmatpush2.msra.mxu0 0.0
    %447 = vmatprep.subr.mxu0 0.0
    %448 = vmatpush2.msra.mxu0 0.0
    %449 = vmatprep.subr.mxu0 0.0
    %450 = vmatpush2.msra.mxu0 0.0
    %451 = vmatprep.subr.mxu0 0.0
    %452 = vmatpush2.msra.mxu0 0.0
    %453 = vmatprep.subr.mxu0 0.0
    %454 = vmatpush2.msra.mxu0 0.0
    %455 = vmatprep.subr.mxu0 0.0
    %456 = vmatpush2.msra.mxu0 0.0
    %457 = vmatprep.subr.mxu0 0.0
    %458 = vmatpush2.msra.mxu0 0.0
    %459 = vmatprep.subr.mxu0 0.0
    %460 = vmatpush2.msra.mxu0 0.0
    %461 = vmatprep.subr.mxu0 0.0
    %462 = vmatpush2.msra.mxu0 0.0
    %463 = vmatprep.subr.mxu0 0.0
    %464 = vmatpush2.msra.mxu0 0.0
    %465 = vmatprep.subr.mxu0 0.0
    %466 = vmatpush2.msra.mxu0 0.0
    %467 = vmatprep.subr.mxu0 0.0
    %468 = vmatpush2.msra.mxu0 0.0
    %469 = vmatprep.subr.mxu0 0.0
    %470 = vmatpush2.msra.mxu0 0.0
    %471 = vmatprep.subr.mxu0 0.0
    %472 = vmatpush2.msra.mxu0 0.0
    %473 = vmatprep.subr.mxu0 0.0
    %474 = vmatpush2.msra.mxu0 0.0
    %475 = vmatprep.subr.mxu0 0.0
    %476 = vmatpush2.msra.mxu0 0.0
    %477 = vmatprep.mubr.f32.mxu0 0.0
    %478 = vmatmul.mubr.f32.gmra.mxu0 %v412
    %v479 = vpop.f32.mrf.mxu0
    %v480 = vadd.f32 0.0, %v479
    %v481 = vpop.f32.mrf.mxu0
    %482 = vdwg.mxu0
    %483 = vadd.xlane.f32.xlu0 %v480
    %v484 = vpop.xlane.xlu0 %483
    %v485 = vrcp.pop 128.0
    %v486 = vmul.f32 %v484, %v485
    %v487 = vmul.f32 %v480, %v480
    %488 = vadd.xlane.f32.xlu0 %v487
    %v489 = vpop.xlane.xlu0 %488
    %v490 = vmul.f32 %v489, %v485
    %v491 = vmul.f32 %v486, %v486
    %v492 = vsub.f32 %v490, %v491
    %v493 = vmax.f32 %v492, 0.0
    %v494 = vadd.f32 %v493, 1e-05
    %v495 = vrsqrt.pop %v494
    %v496 = vmul.f32 %v480, %v495
    %v497 = vmul.f32 %v486, %v495
    %v498 = vsub.f32 %v496, %v497
    %v499 = vlaneseq
    %v500 = vshrl.u32 %v499, 7
    %v501 = vsub.s32 0, %v500
    %v502 = vrot.slane %v27, %v501
    %v503 = vmul.f32 %v498, %v502
    %v504 = vlaneseq
    %v505 = vshrl.u32 %v504, 7
    %v506 = vsub.s32 0, %v505
    %v507 = vrot.slane %v28, %v506
    %v508 = vadd.f32 %v503, %v507
    %v509 = vmax.f32 %v508, 0.0
    %v510 = vld [vmem:[#allocation3] sm:$0xff]
    %511 = vmatprep.subr.mxu0 0.0
    %512 = vmatpush1.msra.mxu0 %v62
    %513 = vmatprep.subr.mxu0 0.0
    %514 = vmatpush1.msra.mxu0 %v61
    %515 = vmatprep.subr.mxu0 0.0
    %516 = vmatpush1.msra.mxu0 %v60
    %517 = vmatprep.subr.mxu0 0.0
    %518 = vmatpush1.msra.mxu0 %v59
    %519 = vmatprep.subr.mxu0 0.0
    %520 = vmatpush1.msra.mxu0 %v58
    %521 = vmatprep.subr.mxu0 0.0
    %522 = vmatpush1.msra.mxu0 %v57
    %523 = vmatprep.subr.mxu0 0.0
    %524 = vmatpush1.msra.mxu0 %v56
    %525 = vmatprep.subr.mxu0 0.0
    %526 = vmatpush1.msra.mxu0 %v55
    %527 = vmatprep.subr.mxu0 0.0
    %528 = vmatpush1.msra.mxu0 %v54
    %529 = vmatprep.subr.mxu0 0.0
    %530 = vmatpush1.msra.mxu0 %v53
    %531 = vmatprep.subr.mxu0 0.0
    %532 = vmatpush1.msra.mxu0 %v52
    %533 = vmatprep.subr.mxu0 0.0
    %534 = vmatpush1.msra.mxu0 %v51
    %535 = vmatprep.subr.mxu0 0.0
    %536 = vmatpush1.msra.mxu0 %v50
    %537 = vmatprep.subr.mxu0 0.0
    %538 = vmatpush1.msra.mxu0 %v49
    %539 = vmatprep.subr.mxu0 0.0
    %540 = vmatpush1.msra.mxu0 %v48
    %541 = vmatprep.subr.mxu0 0.0
    %542 = vmatpush1.msra.mxu0 %v47
    %543 = vmatprep.subr.mxu0 0.0
    %544 = vmatpush2.msra.mxu0 0.0
    %545 = vmatprep.subr.mxu0 0.0
    %546 = vmatpush2.msra.mxu0 0.0
    %547 = vmatprep.subr.mxu0 0.0
    %548 = vmatpush2.msra.mxu0 0.0
    %549 = vmatprep.subr.mxu0 0.0
    %550 = vmatpush2.msra.mxu0 0.0
    %551 = vmatprep.subr.mxu0 0.0
    %552 = vmatpush2.msra.mxu0 0.0
    %553 = vmatprep.subr.mxu0 0.0
    %554 = vmatpush2.msra.mxu0 0.0
    %555 = vmatprep.subr.mxu0 0.0
    %556 = vmatpush2.msra.mxu0 0.0
    %557 = vmatprep.subr.mxu0 0.0
    %558 = vmatpush2.msra.mxu0 0.0
    %559 = vmatprep.subr.mxu0 0.0
    %560 = vmatpush2.msra.mxu0 0.0
    %561 = vmatprep.subr.mxu0 0.0
    %562 = vmatpush2.msra.mxu0 0.0
    %563 = vmatprep.subr.mxu0 0.0
    %564 = vmatpush2.msra.mxu0 0.0
    %565 = vmatprep.subr.mxu0 0.0
    %566 = vmatpush2.msra.mxu0 0.0
    %567 = vmatprep.subr.mxu0 0.0
    %568 = vmatpush2.msra.mxu0 0.0
    %569 = vmatprep.subr.mxu0 0.0
    %570 = vmatpush2.msra.mxu0 0.0
    %571 = vmatprep.subr.mxu0 0.0
    %572 = vmatpush2.msra.mxu0 0.0
    %573 = vmatprep.subr.mxu0 0.0
    %574 = vmatpush2.msra.mxu0 0.0
    %575 = vmatprep.mubr.f32.mxu0 0.0
    %576 = vmatmul.mubr.f32.gmra.mxu0 %v509
    %v577 = vpop.f32.mrf.mxu0
    %v578 = vadd.f32 %v510, %v577
    %v579 = vpop.f32.mrf.mxu0
    %580 = vdwg.mxu0
    %581 = vadd.xlane.f32.xlu0 %v578
    %v582 = vpop.xlane.xlu0 %581
    %v583 = vmul.f32 %v582, %v485
    %v584 = vmul.f32 %v578, %v578
    %585 = vadd.xlane.f32.xlu0 %v584
    %v586 = vpop.xlane.xlu0 %585
    %v587 = vmul.f32 %v586, %v485
    %v588 = vmul.f32 %v583, %v583
    %v589 = vsub.f32 %v587, %v588
    %v590 = vmax.f32 %v589, 0.0
    %v591 = vadd.f32 %v590, 1e-05
    %v592 = vrsqrt.pop %v591
    %v593 = vmul.f32 %v578, %v592
    %v594 = vmul.f32 %v583, %v592
    %v595 = vsub.f32 %v593, %v594
    %v596 = vlaneseq
    %v597 = vshrl.u32 %v596, 7
    %v598 = vsub.s32 0, %v597
    %v599 = vrot.slane %v29, %v598
    %v600 = vmul.f32 %v595, %v599
    %v601 = vlaneseq
    %v602 = vshrl.u32 %v601, 7
    %v603 = vsub.s32 0, %v602
    %v604 = vrot.slane %v30, %v603
    %v605 = vadd.f32 %v600, %v604
    %v606 = vmax.f32 %v605, 0.0
    %v608 = vcombine.high %v606, %v606
    %610 = vst [vmem:[#allocation4] sm:$0xf] %v606
    %611 = vst [vmem:[#allocation4 + $0x18] sm:$0xf] %v608
    %v612 = vld [vmem:[#allocation2 + $0x8] sm:$0xff]
    %v613 = vadd.f32 %v612, %v410
    %v614 = vmax.f32 %v613, 0.0
    %615 = vmatprep.subr.mxu0 0.0
    %616 = vmatpush1.msra.mxu0 %v46
    %617 = vmatprep.subr.mxu0 0.0
    %618 = vmatpush1.msra.mxu0 %v45
    %619 = vmatprep.subr.mxu0 0.0
    %620 = vmatpush1.msra.mxu0 %v44
    %621 = vmatprep.subr.mxu0 0.0
    %622 = vmatpush1.msra.mxu0 %v43
    %623 = vmatprep.subr.mxu0 0.0
    %624 = vmatpush1.msra.mxu0 %v42
    %625 = vmatprep.subr.mxu0 0.0
    %626 = vmatpush1.msra.mxu0 %v41
    %627 = vmatprep.subr.mxu0 0.0
    %628 = vmatpush1.msra.mxu0 %v40
    %629 = vmatprep.subr.mxu0 0.0
    %630 = vmatpush1.msra.mxu0 %v39
    %631 = vmatprep.subr.mxu0 0.0
    %632 = vmatpush1.msra.mxu0 %v38
    %633 = vmatprep.subr.mxu0 0.0
    %634 = vmatpush1.msra.mxu0 %v37
    %635 = vmatprep.subr.mxu0 0.0
    %636 = vmatpush1.msra.mxu0 %v36
    %637 = vmatprep.subr.mxu0 0.0
    %638 = vmatpush1.msra.mxu0 %v35
    %639 = vmatprep.subr.mxu0 0.0
    %640 = vmatpush1.msra.mxu0 %v34
    %641 = vmatprep.subr.mxu0 0.0
    %642 = vmatpush1.msra.mxu0 %v33
    %643 = vmatprep.subr.mxu0 0.0
    %644 = vmatpush1.msra.mxu0 %v32
    %645 = vmatprep.subr.mxu0 0.0
    %646 = vmatpush1.msra.mxu0 %v31
    %647 = vmatprep.subr.mxu0 0.0
    %648 = vmatpush2.msra.mxu0 0.0
    %649 = vmatprep.subr.mxu0 0.0
    %650 = vmatpush2.msra.mxu0 0.0
    %651 = vmatprep.subr.mxu0 0.0
    %652 = vmatpush2.msra.mxu0 0.0
    %653 = vmatprep.subr.mxu0 0.0
    %654 = vmatpush2.msra.mxu0 0.0
    %655 = vmatprep.subr.mxu0 0.0
    %656 = vmatpush2.msra.mxu0 0.0
    %657 = vmatprep.subr.mxu0 0.0
    %658 = vmatpush2.msra.mxu0 0.0
    %659 = vmatprep.subr.mxu0 0.0
    %660 = vmatpush2.msra.mxu0 0.0
    %661 = vmatprep.subr.mxu0 0.0
    %662 = vmatpush2.msra.mxu0 0.0
    %663 = vmatprep.subr.mxu0 0.0
    %664 = vmatpush2.msra.mxu0 0.0
    %665 = vmatprep.subr.mxu0 0.0
    %666 = vmatpush2.msra.mxu0 0.0
    %667 = vmatprep.subr.mxu0 0.0
    %668 = vmatpush2.msra.mxu0 0.0
    %669 = vmatprep.subr.mxu0 0.0
    %670 = vmatpush2.msra.mxu0 0.0
    %671 = vmatprep.subr.mxu0 0.0
    %672 = vmatpush2.msra.mxu0 0.0
    %673 = vmatprep.subr.mxu0 0.0
    %674 = vmatpush2.msra.mxu0 0.0
    %675 = vmatprep.subr.mxu0 0.0
    %676 = vmatpush2.msra.mxu0 0.0
    %677 = vmatprep.subr.mxu0 0.0
    %678 = vmatpush2.msra.mxu0 0.0
    %679 = vmatprep.mubr.f32.mxu0 0.0
    %680 = vmatmul.mubr.f32.gmra.mxu0 %v614
    %v681 = vpop.f32.mrf.mxu0
    %v682 = vadd.f32 0.0, %v681
    %v683 = vpop.f32.mrf.mxu0
    %684 = vdwg.mxu0
    %685 = vadd.xlane.f32.xlu0 %v682
    %v686 = vpop.xlane.xlu0 %685
    %v687 = vmul.f32 %v686, %v485
    %v688 = vmul.f32 %v682, %v682
    %689 = vadd.xlane.f32.xlu0 %v688
    %v690 = vpop.xlane.xlu0 %689
    %v691 = vmul.f32 %v690, %v485
    %v692 = vmul.f32 %v687, %v687
    %v693 = vsub.f32 %v691, %v692
    %v694 = vmax.f32 %v693, 0.0
    %v695 = vadd.f32 %v694, 1e-05
    %v696 = vrsqrt.pop %v695
    %v697 = vmul.f32 %v682, %v696
    %v698 = vmul.f32 %v687, %v696
    %v699 = vsub.f32 %v697, %v698
    %v700 = vmul.f32 %v699, %v502
    %v701 = vadd.f32 %v700, %v507
    %v702 = vmax.f32 %v701, 0.0
    %v703 = vld [vmem:[#allocation3] sm:$0xff]
    %704 = vmatprep.subr.mxu0 0.0
    %705 = vmatpush1.msra.mxu0 %v62
    %706 = vmatprep.subr.mxu0 0.0
    %707 = vmatpush1.msra.mxu0 %v61
    %708 = vmatprep.subr.mxu0 0.0
    %709 = vmatpush1.msra.mxu0 %v60
    %710 = vmatprep.subr.mxu0 0.0
    %711 = vmatpush1.msra.mxu0 %v59
    %712 = vmatprep.subr.mxu0 0.0
    %713 = vmatpush1.msra.mxu0 %v58
    %714 = vmatprep.subr.mxu0 0.0
    %715 = vmatpush1.msra.mxu0 %v57
    %716 = vmatprep.subr.mxu0 0.0
    %717 = vmatpush1.msra.mxu0 %v56
    %718 = vmatprep.subr.mxu0 0.0
    %719 = vmatpush1.msra.mxu0 %v55
    %720 = vmatprep.subr.mxu0 0.0
    %721 = vmatpush1.msra.mxu0 %v54
    %722 = vmatprep.subr.mxu0 0.0
    %723 = vmatpush1.msra.mxu0 %v53
    %724 = vmatprep.subr.mxu0 0.0
    %725 = vmatpush1.msra.mxu0 %v52
    %726 = vmatprep.subr.mxu0 0.0
    %727 = vmatpush1.msra.mxu0 %v51
    %728 = vmatprep.subr.mxu0 0.0
    %729 = vmatpush1.msra.mxu0 %v50
    %730 = vmatprep.subr.mxu0 0.0
    %731 = vmatpush1.msra.mxu0 %v49
    %732 = vmatprep.subr.mxu0 0.0
    %733 = vmatpush1.msra.mxu0 %v48
    %734 = vmatprep.subr.mxu0 0.0
    %735 = vmatpush1.msra.mxu0 %v47
    %736 = vmatprep.subr.mxu0 0.0
    %737 = vmatpush2.msra.mxu0 0.0
    %738 = vmatprep.subr.mxu0 0.0
    %739 = vmatpush2.msra.mxu0 0.0
    %740 = vmatprep.subr.mxu0 0.0
    %741 = vmatpush2.msra.mxu0 0.0
    %742 = vmatprep.subr.mxu0 0.0
    %743 = vmatpush2.msra.mxu0 0.0
    %744 = vmatprep.subr.mxu0 0.0
    %745 = vmatpush2.msra.mxu0 0.0
    %746 = vmatprep.subr.mxu0 0.0
    %747 = vmatpush2.msra.mxu0 0.0
    %748 = vmatprep.subr.mxu0 0.0
    %749 = vmatpush2.msra.mxu0 0.0
    %750 = vmatprep.subr.mxu0 0.0
    %751 = vmatpush2.msra.mxu0 0.0
    %752 = vmatprep.subr.mxu0 0.0
    %753 = vmatpush2.msra.mxu0 0.0
    %754 = vmatprep.subr.mxu0 0.0
    %755 = vmatpush2.msra.mxu0 0.0
    %756 = vmatprep.subr.mxu0 0.0
    %757 = vmatpush2.msra.mxu0 0.0
    %758 = vmatprep.subr.mxu0 0.0
    %759 = vmatpush2.msra.mxu0 0.0
    %760 = vmatprep.subr.mxu0 0.0
    %761 = vmatpush2.msra.mxu0 0.0
    %762 = vmatprep.subr.mxu0 0.0
    %763 = vmatpush2.msra.mxu0 0.0
    %764 = vmatprep.subr.mxu0 0.0
    %765 = vmatpush2.msra.mxu0 0.0
    %766 = vmatprep.subr.mxu0 0.0
    %767 = vmatpush2.msra.mxu0 0.0
    %768 = vmatprep.mubr.f32.mxu0 0.0
    %769 = vmatmul.mubr.f32.gmra.mxu0 %v702
    %v770 = vpop.f32.mrf.mxu0
    %v771 = vadd.f32 %v703, %v770
    %v772 = vpop.f32.mrf.mxu0
    %773 = vdwg.mxu0
    %774 = vadd.xlane.f32.xlu0 %v771
    %v775 = vpop.xlane.xlu0 %774
    %v776 = vmul.f32 %v775, %v485
    %v777 = vmul.f32 %v771, %v771
    %778 = vadd.xlane.f32.xlu0 %v777
    %v779 = vpop.xlane.xlu0 %778
    %v780 = vmul.f32 %v779, %v485
    %v781 = vmul.f32 %v776, %v776
    %v782 = vsub.f32 %v780, %v781
    %v783 = vmax.f32 %v782, 0.0
    %v784 = vadd.f32 %v783, 1e-05
    %v785 = vrsqrt.pop %v784
    %v786 = vmul.f32 %v771, %v785
    %v787 = vmul.f32 %v776, %v785
    %v788 = vsub.f32 %v786, %v787
    %v789 = vmul.f32 %v788, %v599
    %v790 = vadd.f32 %v789, %v604
    %v791 = vmax.f32 %v790, 0.0
    %v793 = vcombine.high %v791, %v791
    %795 = vst [vmem:[#allocation4 + $0x4] sm:$0xf] %v791
    %796 = vst [vmem:[#allocation4 + $0x1c] sm:$0xf] %v793
    %v797 = vld [vmem:[#allocation2 + $0x10] sm:$0xff]
    %v798 = vadd.f32 %v797, %v410
    %v799 = vmax.f32 %v798, 0.0
    %800 = vmatprep.subr.mxu0 0.0
    %801 = vmatpush1.msra.mxu0 %v46
    %802 = vmatprep.subr.mxu0 0.0
    %803 = vmatpush1.msra.mxu0 %v45
    %804 = vmatprep.subr.mxu0 0.0
    %805 = vmatpush1.msra.mxu0 %v44
    %806 = vmatprep.subr.mxu0 0.0
    %807 = vmatpush1.msra.mxu0 %v43
    %808 = vmatprep.subr.mxu0 0.0
    %809 = vmatpush1.msra.mxu0 %v42
    %810 = vmatprep.subr.mxu0 0.0
    %811 = vmatpush1.msra.mxu0 %v41
    %812 = vmatprep.subr.mxu0 0.0
    %813 = vmatpush1.msra.mxu0 %v40
    %814 = vmatprep.subr.mxu0 0.0
    %815 = vmatpush1.msra.mxu0 %v39
    %816 = vmatprep.subr.mxu0 0.0
    %817 = vmatpush1.msra.mxu0 %v38
    %818 = vmatprep.subr.mxu0 0.0
    %819 = vmatpush1.msra.mxu0 %v37
    %820 = vmatprep.subr.mxu0 0.0
    %821 = vmatpush1.msra.mxu0 %v36
    %822 = vmatprep.subr.mxu0 0.0
    %823 = vmatpush1.msra.mxu0 %v35
    %824 = vmatprep.subr.mxu0 0.0
    %825 = vmatpush1.msra.mxu0 %v34
    %826 = vmatprep.subr.mxu0 0.0
    %827 = vmatpush1.msra.mxu0 %v33
    %828 = vmatprep.subr.mxu0 0.0
    %829 = vmatpush1.msra.mxu0 %v32
    %830 = vmatprep.subr.mxu0 0.0
    %831 = vmatpush1.msra.mxu0 %v31
    %832 = vmatprep.subr.mxu0 0.0
    %833 = vmatpush2.msra.mxu0 0.0
    %834 = vmatprep.subr.mxu0 0.0
    %835 = vmatpush2.msra.mxu0 0.0
    %836 = vmatprep.subr.mxu0 0.0
    %837 = vmatpush2.msra.mxu0 0.0
    %838 = vmatprep.subr.mxu0 0.0
    %839 = vmatpush2.msra.mxu0 0.0
    %840 = vmatprep.subr.mxu0 0.0
    %841 = vmatpush2.msra.mxu0 0.0
    %842 = vmatprep.subr.mxu0 0.0
    %843 = vmatpush2.msra.mxu0 0.0
    %844 = vmatprep.subr.mxu0 0.0
    %845 = vmatpush2.msra.mxu0 0.0
    %846 = vmatprep.subr.mxu0 0.0
    %847 = vmatpush2.msra.mxu0 0.0
    %848 = vmatprep.subr.mxu0 0.0
    %849 = vmatpush2.msra.mxu0 0.0
    %850 = vmatprep.subr.mxu0 0.0
    %851 = vmatpush2.msra.mxu0 0.0
    %852 = vmatprep.subr.mxu0 0.0
    %853 = vmatpush2.msra.mxu0 0.0
    %854 = vmatprep.subr.mxu0 0.0
    %855 = vmatpush2.msra.mxu0 0.0
    %856 = vmatprep.subr.mxu0 0.0
    %857 = vmatpush2.msra.mxu0 0.0
    %858 = vmatprep.subr.mxu0 0.0
    %859 = vmatpush2.msra.mxu0 0.0
    %860 = vmatprep.subr.mxu0 0.0
    %861 = vmatpush2.msra.mxu0 0.0
    %862 = vmatprep.subr.mxu0 0.0
    %863 = vmatpush2.msra.mxu0 0.0
    %864 = vmatprep.mubr.f32.mxu0 0.0
    %865 = vmatmul.mubr.f32.gmra.mxu0 %v799
    %v866 = vpop.f32.mrf.mxu0
    %v867 = vadd.f32 0.0, %v866
    %v868 = vpop.f32.mrf.mxu0
    %869 = vdwg.mxu0
    %870 = vadd.xlane.f32.xlu0 %v867
    %v871 = vpop.xlane.xlu0 %870
    %v872 = vmul.f32 %v871, %v485
    %v873 = vmul.f32 %v867, %v867
    %874 = vadd.xlane.f32.xlu0 %v873
    %v875 = vpop.xlane.xlu0 %874
    %v876 = vmul.f32 %v875, %v485
    %v877 = vmul.f32 %v872, %v872
    %v878 = vsub.f32 %v876, %v877
    %v879 = vmax.f32 %v878, 0.0
    %v880 = vadd.f32 %v879, 1e-05
    %v881 = vrsqrt.pop %v880
    %v882 = vmul.f32 %v867, %v881
    %v883 = vmul.f32 %v872, %v881
    %v884 = vsub.f32 %v882, %v883
    %v885 = vmul.f32 %v884, %v502
    %v886 = vadd.f32 %v885, %v507
    %v887 = vmax.f32 %v886, 0.0
    %v888 = vld [vmem:[#allocation3] sm:$0xff]
    %889 = vmatprep.subr.mxu0 0.0
    %890 = vmatpush1.msra.mxu0 %v62
    %891 = vmatprep.subr.mxu0 0.0
    %892 = vmatpush1.msra.mxu0 %v61
    %893 = vmatprep.subr.mxu0 0.0
    %894 = vmatpush1.msra.mxu0 %v60
    %895 = vmatprep.subr.mxu0 0.0
    %896 = vmatpush1.msra.mxu0 %v59
    %897 = vmatprep.subr.mxu0 0.0
    %898 = vmatpush1.msra.mxu0 %v58
    %899 = vmatprep.subr.mxu0 0.0
    %900 = vmatpush1.msra.mxu0 %v57
    %901 = vmatprep.subr.mxu0 0.0
    %902 = vmatpush1.msra.mxu0 %v56
    %903 = vmatprep.subr.mxu0 0.0
    %904 = vmatpush1.msra.mxu0 %v55
    %905 = vmatprep.subr.mxu0 0.0
    %906 = vmatpush1.msra.mxu0 %v54
    %907 = vmatprep.subr.mxu0 0.0
    %908 = vmatpush1.msra.mxu0 %v53
    %909 = vmatprep.subr.mxu0 0.0
    %910 = vmatpush1.msra.mxu0 %v52
    %911 = vmatprep.subr.mxu0 0.0
    %912 = vmatpush1.msra.mxu0 %v51
    %913 = vmatprep.subr.mxu0 0.0
    %914 = vmatpush1.msra.mxu0 %v50
    %915 = vmatprep.subr.mxu0 0.0
    %916 = vmatpush1.msra.mxu0 %v49
    %917 = vmatprep.subr.mxu0 0.0
    %918 = vmatpush1.msra.mxu0 %v48
    %919 = vmatprep.subr.mxu0 0.0
    %920 = vmatpush1.msra.mxu0 %v47
    %921 = vmatprep.subr.mxu0 0.0
    %922 = vmatpush2.msra.mxu0 0.0
    %923 = vmatprep.subr.mxu0 0.0
    %924 = vmatpush2.msra.mxu0 0.0
    %925 = vmatprep.subr.mxu0 0.0
    %926 = vmatpush2.msra.mxu0 0.0
    %927 = vmatprep.subr.mxu0 0.0
    %928 = vmatpush2.msra.mxu0 0.0
    %929 = vmatprep.subr.mxu0 0.0
    %930 = vmatpush2.msra.mxu0 0.0
    %931 = vmatprep.subr.mxu0 0.0
    %932 = vmatpush2.msra.mxu0 0.0
    %933 = vmatprep.subr.mxu0 0.0
    %934 = vmatpush2.msra.mxu0 0.0
    %935 = vmatprep.subr.mxu0 0.0
    %936 = vmatpush2.msra.mxu0 0.0
    %937 = vmatprep.subr.mxu0 0.0
    %938 = vmatpush2.msra.mxu0 0.0
    %939 = vmatprep.subr.mxu0 0.0
    %940 = vmatpush2.msra.mxu0 0.0
    %941 = vmatprep.subr.mxu0 0.0
    %942 = vmatpush2.msra.mxu0 0.0
    %943 = vmatprep.subr.mxu0 0.0
    %944 = vmatpush2.msra.mxu0 0.0
    %945 = vmatprep.subr.mxu0 0.0
    %946 = vmatpush2.msra.mxu0 0.0
    %947 = vmatprep.subr.mxu0 0.0
    %948 = vmatpush2.msra.mxu0 0.0
    %949 = vmatprep.subr.mxu0 0.0
    %950 = vmatpush2.msra.mxu0 0.0
    %951 = vmatprep.subr.mxu0 0.0
    %952 = vmatpush2.msra.mxu0 0.0
    %953 = vmatprep.mubr.f32.mxu0 0.0
    %954 = vmatmul.mubr.f32.gmra.mxu0 %v887
    %v955 = vpop.f32.mrf.mxu0
    %v956 = vadd.f32 %v888, %v955
    %v957 = vpop.f32.mrf.mxu0
    %958 = vdwg.mxu0
    %959 = vadd.xlane.f32.xlu0 %v956
    %v960 = vpop.xlane.xlu0 %959
    %v961 = vmul.f32 %v960, %v485
    %v962 = vmul.f32 %v956, %v956
    %963 = vadd.xlane.f32.xlu0 %v962
    %v964 = vpop.xlane.xlu0 %963
    %v965 = vmul.f32 %v964, %v485
    %v966 = vmul.f32 %v961, %v961
    %v967 = vsub.f32 %v965, %v966
    %v968 = vmax.f32 %v967, 0.0
    %v969 = vadd.f32 %v968, 1e-05
    %v970 = vrsqrt.pop %v969
    %v971 = vmul.f32 %v956, %v970
    %v972 = vmul.f32 %v961, %v970
    %v973 = vsub.f32 %v971, %v972
    %v974 = vmul.f32 %v973, %v599
    %v975 = vadd.f32 %v974, %v604
    %v976 = vmax.f32 %v975, 0.0
    %v978 = vcombine.high %v976, %v976
    %980 = vst [vmem:[#allocation4 + $0x8] sm:$0xf] %v976
    %981 = vst [vmem:[#allocation4 + $0x20] sm:$0xf] %v978
    %v982 = vld [vmem:[#allocation2 + $0x18] sm:$0xff]
    %v983 = vadd.f32 %v982, %v410
    %v984 = vmax.f32 %v983, 0.0
    %985 = vmatprep.subr.mxu0 0.0
    %986 = vmatpush1.msra.mxu0 %v46
    %987 = vmatprep.subr.mxu0 0.0
    %988 = vmatpush1.msra.mxu0 %v45
    %989 = vmatprep.subr.mxu0 0.0
    %990 = vmatpush1.msra.mxu0 %v44
    %991 = vmatprep.subr.mxu0 0.0
    %992 = vmatpush1.msra.mxu0 %v43
    %993 = vmatprep.subr.mxu0 0.0
    %994 = vmatpush1.msra.mxu0 %v42
    %995 = vmatprep.subr.mxu0 0.0
    %996 = vmatpush1.msra.mxu0 %v41
    %997 = vmatprep.subr.mxu0 0.0
    %998 = vmatpush1.msra.mxu0 %v40
    %999 = vmatprep.subr.mxu0 0.0
    %1000 = vmatpush1.msra.mxu0 %v39
    %1001 = vmatprep.subr.mxu0 0.0
    %1002 = vmatpush1.msra.mxu0 %v38
    %1003 = vmatprep.subr.mxu0 0.0
    %1004 = vmatpush1.msra.mxu0 %v37
    %1005 = vmatprep.subr.mxu0 0.0
    %1006 = vmatpush1.msra.mxu0 %v36
    %1007 = vmatprep.subr.mxu0 0.0
    %1008 = vmatpush1.msra.mxu0 %v35
    %1009 = vmatprep.subr.mxu0 0.0
    %1010 = vmatpush1.msra.mxu0 %v34
    %1011 = vmatprep.subr.mxu0 0.0
    %1012 = vmatpush1.msra.mxu0 %v33
    %1013 = vmatprep.subr.mxu0 0.0
    %1014 = vmatpush1.msra.mxu0 %v32
    %1015 = vmatprep.subr.mxu0 0.0
    %1016 = vmatpush1.msra.mxu0 %v31
    %1017 = vmatprep.subr.mxu0 0.0
    %1018 = vmatpush2.msra.mxu0 0.0
    %1019 = vmatprep.subr.mxu0 0.0
    %1020 = vmatpush2.msra.mxu0 0.0
    %1021 = vmatprep.subr.mxu0 0.0
    %1022 = vmatpush2.msra.mxu0 0.0
    %1023 = vmatprep.subr.mxu0 0.0
    %1024 = vmatpush2.msra.mxu0 0.0
    %1025 = vmatprep.subr.mxu0 0.0
    %1026 = vmatpush2.msra.mxu0 0.0
    %1027 = vmatprep.subr.mxu0 0.0
    %1028 = vmatpush2.msra.mxu0 0.0
    %1029 = vmatprep.subr.mxu0 0.0
    %1030 = vmatpush2.msra.mxu0 0.0
    %1031 = vmatprep.subr.mxu0 0.0
    %1032 = vmatpush2.msra.mxu0 0.0
    %1033 = vmatprep.subr.mxu0 0.0
    %1034 = vmatpush2.msra.mxu0 0.0
    %1035 = vmatprep.subr.mxu0 0.0
    %1036 = vmatpush2.msra.mxu0 0.0
    %1037 = vmatprep.subr.mxu0 0.0
    %1038 = vmatpush2.msra.mxu0 0.0
    %1039 = vmatprep.subr.mxu0 0.0
    %1040 = vmatpush2.msra.mxu0 0.0
    %1041 = vmatprep.subr.mxu0 0.0
    %1042 = vmatpush2.msra.mxu0 0.0
    %1043 = vmatprep.subr.mxu0 0.0
    %1044 = vmatpush2.msra.mxu0 0.0
    %1045 = vmatprep.subr.mxu0 0.0
    %1046 = vmatpush2.msra.mxu0 0.0
    %1047 = vmatprep.subr.mxu0 0.0
    %1048 = vmatpush2.msra.mxu0 0.0
    %1049 = vmatprep.mubr.f32.mxu0 0.0
    %1050 = vmatmul.mubr.f32.gmra.mxu0 %v984
    %v1051 = vpop.f32.mrf.mxu0
    %v1052 = vadd.f32 0.0, %v1051
    %v1053 = vpop.f32.mrf.mxu0
    %1054 = vdwg.mxu0
    %1055 = vadd.xlane.f32.xlu0 %v1052
    %v1056 = vpop.xlane.xlu0 %1055
    %v1057 = vmul.f32 %v1056, %v485
    %v1058 = vmul.f32 %v1052, %v1052
    %1059 = vadd.xlane.f32.xlu0 %v1058
    %v1060 = vpop.xlane.xlu0 %1059
    %v1061 = vmul.f32 %v1060, %v485
    %v1062 = vmul.f32 %v1057, %v1057
    %v1063 = vsub.f32 %v1061, %v1062
    %v1064 = vmax.f32 %v1063, 0.0
    %v1065 = vadd.f32 %v1064, 1e-05
    %v1066 = vrsqrt.pop %v1065
    %v1067 = vmul.f32 %v1052, %v1066
    %v1068 = vmul.f32 %v1057, %v1066
    %v1069 = vsub.f32 %v1067, %v1068
    %v1070 = vmul.f32 %v1069, %v502
    %v1071 = vadd.f32 %v1070, %v507
    %v1072 = vmax.f32 %v1071, 0.0
    %v1073 = vld [vmem:[#allocation3] sm:$0xff]
    %1074 = vmatprep.subr.mxu0 0.0
    %1075 = vmatpush1.msra.mxu0 %v62
    %1076 = vmatprep.subr.mxu0 0.0
    %1077 = vmatpush1.msra.mxu0 %v61
    %1078 = vmatprep.subr.mxu0 0.0
    %1079 = vmatpush1.msra.mxu0 %v60
    %1080 = vmatprep.subr.mxu0 0.0
    %1081 = vmatpush1.msra.mxu0 %v59
    %1082 = vmatprep.subr.mxu0 0.0
    %1083 = vmatpush1.msra.mxu0 %v58
    %1084 = vmatprep.subr.mxu0 0.0
    %1085 = vmatpush1.msra.mxu0 %v57
    %1086 = vmatprep.subr.mxu0 0.0
    %1087 = vmatpush1.msra.mxu0 %v56
    %1088 = vmatprep.subr.mxu0 0.0
    %1089 = vmatpush1.msra.mxu0 %v55
    %1090 = vmatprep.subr.mxu0 0.0
    %1091 = vmatpush1.msra.mxu0 %v54
    %1092 = vmatprep.subr.mxu0 0.0
    %1093 = vmatpush1.msra.mxu0 %v53
    %1094 = vmatprep.subr.mxu0 0.0
    %1095 = vmatpush1.msra.mxu0 %v52
    %1096 = vmatprep.subr.mxu0 0.0
    %1097 = vmatpush1.msra.mxu0 %v51
    %1098 = vmatprep.subr.mxu0 0.0
    %1099 = vmatpush1.msra.mxu0 %v50
    %1100 = vmatprep.subr.mxu0 0.0
    %1101 = vmatpush1.msra.mxu0 %v49
    %1102 = vmatprep.subr.mxu0 0.0
    %1103 = vmatpush1.msra.mxu0 %v48
    %1104 = vmatprep.subr.mxu0 0.0
    %1105 = vmatpush1.msra.mxu0 %v47
    %1106 = vmatprep.subr.mxu0 0.0
    %1107 = vmatpush2.msra.mxu0 0.0
    %1108 = vmatprep.subr.mxu0 0.0
    %1109 = vmatpush2.msra.mxu0 0.0
    %1110 = vmatprep.subr.mxu0 0.0
    %1111 = vmatpush2.msra.mxu0 0.0
    %1112 = vmatprep.subr.mxu0 0.0
    %1113 = vmatpush2.msra.mxu0 0.0
    %1114 = vmatprep.subr.mxu0 0.0
    %1115 = vmatpush2.msra.mxu0 0.0
    %1116 = vmatprep.subr.mxu0 0.0
    %1117 = vmatpush2.msra.mxu0 0.0
    %1118 = vmatprep.subr.mxu0 0.0
    %1119 = vmatpush2.msra.mxu0 0.0
    %1120 = vmatprep.subr.mxu0 0.0
    %1121 = vmatpush2.msra.mxu0 0.0
    %1122 = vmatprep.subr.mxu0 0.0
    %1123 = vmatpush2.msra.mxu0 0.0
    %1124 = vmatprep.subr.mxu0 0.0
    %1125 = vmatpush2.msra.mxu0 0.0
    %1126 = vmatprep.subr.mxu0 0.0
    %1127 = vmatpush2.msra.mxu0 0.0
    %1128 = vmatprep.subr.mxu0 0.0
    %1129 = vmatpush2.msra.mxu0 0.0
    %1130 = vmatprep.subr.mxu0 0.0
    %1131 = vmatpush2.msra.mxu0 0.0
    %1132 = vmatprep.subr.mxu0 0.0
    %1133 = vmatpush2.msra.mxu0 0.0
    %1134 = vmatprep.subr.mxu0 0.0
    %1135 = vmatpush2.msra.mxu0 0.0
    %1136 = vmatprep.subr.mxu0 0.0
    %1137 = vmatpush2.msra.mxu0 0.0
    %1138 = vmatprep.mubr.f32.mxu0 0.0
    %1139 = vmatmul.mubr.f32.gmra.mxu0 %v1072
    %v1140 = vpop.f32.mrf.mxu0
    %v1141 = vadd.f32 %v1073, %v1140
    %v1142 = vpop.f32.mrf.mxu0
    %1143 = vdwg.mxu0
    %1144 = vadd.xlane.f32.xlu0 %v1141
    %v1145 = vpop.xlane.xlu0 %1144
    %v1146 = vmul.f32 %v1145, %v485
    %v1147 = vmul.f32 %v1141, %v1141
    %1148 = vadd.xlane.f32.xlu0 %v1147
    %v1149 = vpop.xlane.xlu0 %1148
    %v1150 = vmul.f32 %v1149, %v485
    %v1151 = vmul.f32 %v1146, %v1146
    %v1152 = vsub.f32 %v1150, %v1151
    %v1153 = vmax.f32 %v1152, 0.0
    %v1154 = vadd.f32 %v1153, 1e-05
    %v1155 = vrsqrt.pop %v1154
    %v1156 = vmul.f32 %v1141, %v1155
    %v1157 = vmul.f32 %v1146, %v1155
    %v1158 = vsub.f32 %v1156, %v1157
    %v1159 = vmul.f32 %v1158, %v599
    %v1160 = vadd.f32 %v1159, %v604
    %v1161 = vmax.f32 %v1160, 0.0
    %v1163 = vcombine.high %v1161, %v1161
    %1165 = vst [vmem:[#allocation4 + $0xc] sm:$0xf] %v1161
    %1166 = vst [vmem:[#allocation4 + $0x24] sm:$0xf] %v1163
    %v1167 = vld [vmem:[#allocation2 + $0x20] sm:$0xff]
    %v1168 = vadd.f32 %v1167, %v410
    %v1169 = vmax.f32 %v1168, 0.0
    %1170 = vmatprep.subr.mxu0 0.0
    %1171 = vmatpush1.msra.mxu0 %v46
    %1172 = vmatprep.subr.mxu0 0.0
    %1173 = vmatpush1.msra.mxu0 %v45
    %1174 = vmatprep.subr.mxu0 0.0
    %1175 = vmatpush1.msra.mxu0 %v44
    %1176 = vmatprep.subr.mxu0 0.0
    %1177 = vmatpush1.msra.mxu0 %v43
    %1178 = vmatprep.subr.mxu0 0.0
    %1179 = vmatpush1.msra.mxu0 %v42
    %1180 = vmatprep.subr.mxu0 0.0
    %1181 = vmatpush1.msra.mxu0 %v41
    %1182 = vmatprep.subr.mxu0 0.0
    %1183 = vmatpush1.msra.mxu0 %v40
    %1184 = vmatprep.subr.mxu0 0.0
    %1185 = vmatpush1.msra.mxu0 %v39
    %1186 = vmatprep.subr.mxu0 0.0
    %1187 = vmatpush1.msra.mxu0 %v38
    %1188 = vmatprep.subr.mxu0 0.0
    %1189 = vmatpush1.msra.mxu0 %v37
    %1190 = vmatprep.subr.mxu0 0.0
    %1191 = vmatpush1.msra.mxu0 %v36
    %1192 = vmatprep.subr.mxu0 0.0
    %1193 = vmatpush1.msra.mxu0 %v35
    %1194 = vmatprep.subr.mxu0 0.0
    %1195 = vmatpush1.msra.mxu0 %v34
    %1196 = vmatprep.subr.mxu0 0.0
    %1197 = vmatpush1.msra.mxu0 %v33
    %1198 = vmatprep.subr.mxu0 0.0
    %1199 = vmatpush1.msra.mxu0 %v32
    %1200 = vmatprep.subr.mxu0 0.0
    %1201 = vmatpush1.msra.mxu0 %v31
    %1202 = vmatprep.subr.mxu0 0.0
    %1203 = vmatpush2.msra.mxu0 0.0
    %1204 = vmatprep.subr.mxu0 0.0
    %1205 = vmatpush2.msra.mxu0 0.0
    %1206 = vmatprep.subr.mxu0 0.0
    %1207 = vmatpush2.msra.mxu0 0.0
    %1208 = vmatprep.subr.mxu0 0.0
    %1209 = vmatpush2.msra.mxu0 0.0
    %1210 = vmatprep.subr.mxu0 0.0
    %1211 = vmatpush2.msra.mxu0 0.0
    %1212 = vmatprep.subr.mxu0 0.0
    %1213 = vmatpush2.msra.mxu0 0.0
    %1214 = vmatprep.subr.mxu0 0.0
    %1215 = vmatpush2.msra.mxu0 0.0
    %1216 = vmatprep.subr.mxu0 0.0
    %1217 = vmatpush2.msra.mxu0 0.0
    %1218 = vmatprep.subr.mxu0 0.0
    %1219 = vmatpush2.msra.mxu0 0.0
    %1220 = vmatprep.subr.mxu0 0.0
    %1221 = vmatpush2.msra.mxu0 0.0
    %1222 = vmatprep.subr.mxu0 0.0
    %1223 = vmatpush2.msra.mxu0 0.0
    %1224 = vmatprep.subr.mxu0 0.0
    %1225 = vmatpush2.msra.mxu0 0.0
    %1226 = vmatprep.subr.mxu0 0.0
    %1227 = vmatpush2.msra.mxu0 0.0
    %1228 = vmatprep.subr.mxu0 0.0
    %1229 = vmatpush2.msra.mxu0 0.0
    %1230 = vmatprep.subr.mxu0 0.0
    %1231 = vmatpush2.msra.mxu0 0.0
    %1232 = vmatprep.subr.mxu0 0.0
    %1233 = vmatpush2.msra.mxu0 0.0
    %1234 = vmatprep.mubr.f32.mxu0 0.0
    %1235 = vmatmul.mubr.f32.gmra.mxu0 %v1169
    %v1236 = vpop.f32.mrf.mxu0
    %v1237 = vadd.f32 0.0, %v1236
    %v1238 = vpop.f32.mrf.mxu0
    %1239 = vdwg.mxu0
    %1240 = vadd.xlane.f32.xlu0 %v1237
    %v1241 = vpop.xlane.xlu0 %1240
    %v1242 = vmul.f32 %v1241, %v485
    %v1243 = vmul.f32 %v1237, %v1237
    %1244 = vadd.xlane.f32.xlu0 %v1243
    %v1245 = vpop.xlane.xlu0 %1244
    %v1246 = vmul.f32 %v1245, %v485
    %v1247 = vmul.f32 %v1242, %v1242
    %v1248 = vsub.f32 %v1246, %v1247
    %v1249 = vmax.f32 %v1248, 0.0
    %v1250 = vadd.f32 %v1249, 1e-05
    %v1251 = vrsqrt.pop %v1250
    %v1252 = vmul.f32 %v1237, %v1251
    %v1253 = vmul.f32 %v1242, %v1251
    %v1254 = vsub.f32 %v1252, %v1253
    %v1255 = vmul.f32 %v1254, %v502
    %v1256 = vadd.f32 %v1255, %v507
    %v1257 = vmax.f32 %v1256, 0.0
    %v1258 = vld [vmem:[#allocation3] sm:$0xff]
    %1259 = vmatprep.subr.mxu0 0.0
    %1260 = vmatpush1.msra.mxu0 %v62
    %1261 = vmatprep.subr.mxu0 0.0
    %1262 = vmatpush1.msra.mxu0 %v61
    %1263 = vmatprep.subr.mxu0 0.0
    %1264 = vmatpush1.msra.mxu0 %v60
    %1265 = vmatprep.subr.mxu0 0.0
    %1266 = vmatpush1.msra.mxu0 %v59
    %1267 = vmatprep.subr.mxu0 0.0
    %1268 = vmatpush1.msra.mxu0 %v58
    %1269 = vmatprep.subr.mxu0 0.0
    %1270 = vmatpush1.msra.mxu0 %v57
    %1271 = vmatprep.subr.mxu0 0.0
    %1272 = vmatpush1.msra.mxu0 %v56
    %1273 = vmatprep.subr.mxu0 0.0
    %1274 = vmatpush1.msra.mxu0 %v55
    %1275 = vmatprep.subr.mxu0 0.0
    %1276 = vmatpush1.msra.mxu0 %v54
    %1277 = vmatprep.subr.mxu0 0.0
    %1278 = vmatpush1.msra.mxu0 %v53
    %1279 = vmatprep.subr.mxu0 0.0
    %1280 = vmatpush1.msra.mxu0 %v52
    %1281 = vmatprep.subr.mxu0 0.0
    %1282 = vmatpush1.msra.mxu0 %v51
    %1283 = vmatprep.subr.mxu0 0.0
    %1284 = vmatpush1.msra.mxu0 %v50
    %1285 = vmatprep.subr.mxu0 0.0
    %1286 = vmatpush1.msra.mxu0 %v49
    %1287 = vmatprep.subr.mxu0 0.0
    %1288 = vmatpush1.msra.mxu0 %v48
    %1289 = vmatprep.subr.mxu0 0.0
    %1290 = vmatpush1.msra.mxu0 %v47
    %1291 = vmatprep.subr.mxu0 0.0
    %1292 = vmatpush2.msra.mxu0 0.0
    %1293 = vmatprep.subr.mxu0 0.0
    %1294 = vmatpush2.msra.mxu0 0.0
    %1295 = vmatprep.subr.mxu0 0.0
    %1296 = vmatpush2.msra.mxu0 0.0
    %1297 = vmatprep.subr.mxu0 0.0
    %1298 = vmatpush2.msra.mxu0 0.0
    %1299 = vmatprep.subr.mxu0 0.0
    %1300 = vmatpush2.msra.mxu0 0.0
    %1301 = vmatprep.subr.mxu0 0.0
    %1302 = vmatpush2.msra.mxu0 0.0
    %1303 = vmatprep.subr.mxu0 0.0
    %1304 = vmatpush2.msra.mxu0 0.0
    %1305 = vmatprep.subr.mxu0 0.0
    %1306 = vmatpush2.msra.mxu0 0.0
    %1307 = vmatprep.subr.mxu0 0.0
    %1308 = vmatpush2.msra.mxu0 0.0
    %1309 = vmatprep.subr.mxu0 0.0
    %1310 = vmatpush2.msra.mxu0 0.0
    %1311 = vmatprep.subr.mxu0 0.0
    %1312 = vmatpush2.msra.mxu0 0.0
    %1313 = vmatprep.subr.mxu0 0.0
    %1314 = vmatpush2.msra.mxu0 0.0
    %1315 = vmatprep.subr.mxu0 0.0
    %1316 = vmatpush2.msra.mxu0 0.0
    %1317 = vmatprep.subr.mxu0 0.0
    %1318 = vmatpush2.msra.mxu0 0.0
    %1319 = vmatprep.subr.mxu0 0.0
    %1320 = vmatpush2.msra.mxu0 0.0
    %1321 = vmatprep.subr.mxu0 0.0
    %1322 = vmatpush2.msra.mxu0 0.0
    %1323 = vmatprep.mubr.f32.mxu0 0.0
    %1324 = vmatmul.mubr.f32.gmra.mxu0 %v1257
    %v1325 = vpop.f32.mrf.mxu0
    %v1326 = vadd.f32 %v1258, %v1325
    %v1327 = vpop.f32.mrf.mxu0
    %1328 = vdwg.mxu0
    %1329 = vadd.xlane.f32.xlu0 %v1326
    %v1330 = vpop.xlane.xlu0 %1329
    %v1331 = vmul.f32 %v1330, %v485
    %v1332 = vmul.f32 %v1326, %v1326
    %1333 = vadd.xlane.f32.xlu0 %v1332
    %v1334 = vpop.xlane.xlu0 %1333
    %v1335 = vmul.f32 %v1334, %v485
    %v1336 = vmul.f32 %v1331, %v1331
    %v1337 = vsub.f32 %v1335, %v1336
    %v1338 = vmax.f32 %v1337, 0.0
    %v1339 = vadd.f32 %v1338, 1e-05
    %v1340 = vrsqrt.pop %v1339
    %v1341 = vmul.f32 %v1326, %v1340
    %v1342 = vmul.f32 %v1331, %v1340
    %v1343 = vsub.f32 %v1341, %v1342
    %v1344 = vmul.f32 %v1343, %v599
    %v1345 = vadd.f32 %v1344, %v604
    %v1346 = vmax.f32 %v1345, 0.0
    %v1348 = vcombine.high %v1346, %v1346
    %1350 = vst [vmem:[#allocation4 + $0x10] sm:$0xf] %v1346
    %1351 = vst [vmem:[#allocation4 + $0x28] sm:$0xf] %v1348
    %v1352 = vld [vmem:[#allocation2 + $0x28] sm:$0xff]
    %v1353 = vadd.f32 %v1352, %v410
    %v1354 = vmax.f32 %v1353, 0.0
    %1355 = vmatprep.subr.mxu0 0.0
    %1356 = vmatpush1.msra.mxu0 %v46
    %1357 = vmatprep.subr.mxu0 0.0
    %1358 = vmatpush1.msra.mxu0 %v45
    %1359 = vmatprep.subr.mxu0 0.0
    %1360 = vmatpush1.msra.mxu0 %v44
    %1361 = vmatprep.subr.mxu0 0.0
    %1362 = vmatpush1.msra.mxu0 %v43
    %1363 = vmatprep.subr.mxu0 0.0
    %1364 = vmatpush1.msra.mxu0 %v42
    %1365 = vmatprep.subr.mxu0 0.0
    %1366 = vmatpush1.msra.mxu0 %v41
    %1367 = vmatprep.subr.mxu0 0.0
    %1368 = vmatpush1.msra.mxu0 %v40
    %1369 = vmatprep.subr.mxu0 0.0
    %1370 = vmatpush1.msra.mxu0 %v39
    %1371 = vmatprep.subr.mxu0 0.0
    %1372 = vmatpush1.msra.mxu0 %v38
    %1373 = vmatprep.subr.mxu0 0.0
    %1374 = vmatpush1.msra.mxu0 %v37
    %1375 = vmatprep.subr.mxu0 0.0
    %1376 = vmatpush1.msra.mxu0 %v36
    %1377 = vmatprep.subr.mxu0 0.0
    %1378 = vmatpush1.msra.mxu0 %v35
    %1379 = vmatprep.subr.mxu0 0.0
    %1380 = vmatpush1.msra.mxu0 %v34
    %1381 = vmatprep.subr.mxu0 0.0
    %1382 = vmatpush1.msra.mxu0 %v33
    %1383 = vmatprep.subr.mxu0 0.0
    %1384 = vmatpush1.msra.mxu0 %v32
    %1385 = vmatprep.subr.mxu0 0.0
    %1386 = vmatpush1.msra.mxu0 %v31
    %1387 = vmatprep.subr.mxu0 0.0
    %1388 = vmatpush2.msra.mxu0 0.0
    %1389 = vmatprep.subr.mxu0 0.0
    %1390 = vmatpush2.msra.mxu0 0.0
    %1391 = vmatprep.subr.mxu0 0.0
    %1392 = vmatpush2.msra.mxu0 0.0
    %1393 = vmatprep.subr.mxu0 0.0
    %1394 = vmatpush2.msra.mxu0 0.0
    %1395 = vmatprep.subr.mxu0 0.0
    %1396 = vmatpush2.msra.mxu0 0.0
    %1397 = vmatprep.subr.mxu0 0.0
    %1398 = vmatpush2.msra.mxu0 0.0
    %1399 = vmatprep.subr.mxu0 0.0
    %1400 = vmatpush2.msra.mxu0 0.0
    %1401 = vmatprep.subr.mxu0 0.0
    %1402 = vmatpush2.msra.mxu0 0.0
    %1403 = vmatprep.subr.mxu0 0.0
    %1404 = vmatpush2.msra.mxu0 0.0
    %1405 = vmatprep.subr.mxu0 0.0
    %1406 = vmatpush2.msra.mxu0 0.0
    %1407 = vmatprep.subr.mxu0 0.0
    %1408 = vmatpush2.msra.mxu0 0.0
    %1409 = vmatprep.subr.mxu0 0.0
    %1410 = vmatpush2.msra.mxu0 0.0
    %1411 = vmatprep.subr.mxu0 0.0
    %1412 = vmatpush2.msra.mxu0 0.0
    %1413 = vmatprep.subr.mxu0 0.0
    %1414 = vmatpush2.msra.mxu0 0.0
    %1415 = vmatprep.subr.mxu0 0.0
    %1416 = vmatpush2.msra.mxu0 0.0
    %1417 = vmatprep.subr.mxu0 0.0
    %1418 = vmatpush2.msra.mxu0 0.0
    %1419 = vmatprep.mubr.f32.mxu0 0.0
    %1420 = vmatmul.mubr.f32.gmra.mxu0 %v1354
    %v1421 = vpop.f32.mrf.mxu0
    %v1422 = vadd.f32 0.0, %v1421
    %v1423 = vpop.f32.mrf.mxu0
    %1424 = vdwg.mxu0
    %1425 = vadd.xlane.f32.xlu0 %v1422
    %v1426 = vpop.xlane.xlu0 %1425
    %v1427 = vmul.f32 %v1426, %v485
    %v1428 = vmul.f32 %v1422, %v1422
    %1429 = vadd.xlane.f32.xlu0 %v1428
    %v1430 = vpop.xlane.xlu0 %1429
    %v1431 = vmul.f32 %v1430, %v485
    %v1432 = vmul.f32 %v1427, %v1427
    %v1433 = vsub.f32 %v1431, %v1432
    %v1434 = vmax.f32 %v1433, 0.0
    %v1435 = vadd.f32 %v1434, 1e-05
    %v1436 = vrsqrt.pop %v1435
    %v1437 = vmul.f32 %v1422, %v1436
    %v1438 = vmul.f32 %v1427, %v1436
    %v1439 = vsub.f32 %v1437, %v1438
    %v1440 = vmul.f32 %v1439, %v502
    %v1441 = vadd.f32 %v1440, %v507
    %v1442 = vmax.f32 %v1441, 0.0
    %v1443 = vld [vmem:[#allocation3] sm:$0xff]
    %1444 = vmatprep.subr.mxu0 0.0
    %1445 = vmatpush1.msra.mxu0 %v62
    %1446 = vmatprep.subr.mxu0 0.0
    %1447 = vmatpush1.msra.mxu0 %v61
    %1448 = vmatprep.subr.mxu0 0.0
    %1449 = vmatpush1.msra.mxu0 %v60
    %1450 = vmatprep.subr.mxu0 0.0
    %1451 = vmatpush1.msra.mxu0 %v59
    %1452 = vmatprep.subr.mxu0 0.0
    %1453 = vmatpush1.msra.mxu0 %v58
    %1454 = vmatprep.subr.mxu0 0.0
    %1455 = vmatpush1.msra.mxu0 %v57
    %1456 = vmatprep.subr.mxu0 0.0
    %1457 = vmatpush1.msra.mxu0 %v56
    %1458 = vmatprep.subr.mxu0 0.0
    %1459 = vmatpush1.msra.mxu0 %v55
    %1460 = vmatprep.subr.mxu0 0.0
    %1461 = vmatpush1.msra.mxu0 %v54
    %1462 = vmatprep.subr.mxu0 0.0
    %1463 = vmatpush1.msra.mxu0 %v53
    %1464 = vmatprep.subr.mxu0 0.0
    %1465 = vmatpush1.msra.mxu0 %v52
    %1466 = vmatprep.subr.mxu0 0.0
    %1467 = vmatpush1.msra.mxu0 %v51
    %1468 = vmatprep.subr.mxu0 0.0
    %1469 = vmatpush1.msra.mxu0 %v50
    %1470 = vmatprep.subr.mxu0 0.0
    %1471 = vmatpush1.msra.mxu0 %v49
    %1472 = vmatprep.subr.mxu0 0.0
    %1473 = vmatpush1.msra.mxu0 %v48
    %1474 = vmatprep.subr.mxu0 0.0
    %1475 = vmatpush1.msra.mxu0 %v47
    %1476 = vmatprep.subr.mxu0 0.0
    %1477 = vmatpush2.msra.mxu0 0.0
    %1478 = vmatprep.subr.mxu0 0.0
    %1479 = vmatpush2.msra.mxu0 0.0
    %1480 = vmatprep.subr.mxu0 0.0
    %1481 = vmatpush2.msra.mxu0 0.0
    %1482 = vmatprep.subr.mxu0 0.0
    %1483 = vmatpush2.msra.mxu0 0.0
    %1484 = vmatprep.subr.mxu0 0.0
    %1485 = vmatpush2.msra.mxu0 0.0
    %1486 = vmatprep.subr.mxu0 0.0
    %1487 = vmatpush2.msra.mxu0 0.0
    %1488 = vmatprep.subr.mxu0 0.0
    %1489 = vmatpush2.msra.mxu0 0.0
    %1490 = vmatprep.subr.mxu0 0.0
    %1491 = vmatpush2.msra.mxu0 0.0
    %1492 = vmatprep.subr.mxu0 0.0
    %1493 = vmatpush2.msra.mxu0 0.0
    %1494 = vmatprep.subr.mxu0 0.0
    %1495 = vmatpush2.msra.mxu0 0.0
    %1496 = vmatprep.subr.mxu0 0.0
    %1497 = vmatpush2.msra.mxu0 0.0
    %1498 = vmatprep.subr.mxu0 0.0
    %1499 = vmatpush2.msra.mxu0 0.0
    %1500 = vmatprep.subr.mxu0 0.0
    %1501 = vmatpush2.msra.mxu0 0.0
    %1502 = vmatprep.subr.mxu0 0.0
    %1503 = vmatpush2.msra.mxu0 0.0
    %1504 = vmatprep.subr.mxu0 0.0
    %1505 = vmatpush2.msra.mxu0 0.0
    %1506 = vmatprep.subr.mxu0 0.0
    %1507 = vmatpush2.msra.mxu0 0.0
    %1508 = vmatprep.mubr.f32.mxu0 0.0
    %1509 = vmatmul.mubr.f32.gmra.mxu0 %v1442
    %v1510 = vpop.f32.mrf.mxu0
    %v1511 = vadd.f32 %v1443, %v1510
    %v1512 = vpop.f32.mrf.mxu0
    %1513 = vdwg.mxu0
    %1514 = vadd.xlane.f32.xlu0 %v1511
    %v1515 = vpop.xlane.xlu0 %1514
    %v1516 = vmul.f32 %v1515, %v485
    %v1517 = vmul.f32 %v1511, %v1511
    %1518 = vadd.xlane.f32.xlu0 %v1517
    %v1519 = vpop.xlane.xlu0 %1518
    %v1520 = vmul.f32 %v1519, %v485
    %v1521 = vmul.f32 %v1516, %v1516
    %v1522 = vsub.f32 %v1520, %v1521
    %v1523 = vmax.f32 %v1522, 0.0
    %v1524 = vadd.f32 %v1523, 1e-05
    %v1525 = vrsqrt.pop %v1524
    %v1526 = vmul.f32 %v1511, %v1525
    %v1527 = vmul.f32 %v1516, %v1525
    %v1528 = vsub.f32 %v1526, %v1527
    %v1529 = vmul.f32 %v1528, %v599
    %v1530 = vadd.f32 %v1529, %v604
    %v1531 = vmax.f32 %v1530, 0.0
    %v1533 = vcombine.high %v1531, %v1531
    %1535 = vst [vmem:[#allocation4 + $0x14] sm:$0xf] %v1531
    %1536 = vst [vmem:[#allocation4 + $0x2c] sm:$0xf] %v1533
    // Predicated region
    $region30: #{att_dest.1} parent=1 // pred_check
      _
    $region31: #{att_dest.1} parent=1 // pred_check_branch
      %1538 = sbr.rel (0) target = $region33
    $region32: #{att_dest.1} parent=1 // pred_region
      // Predicated region
      $region34: #{att_dest.1} parent=32 // pred_check
        _
      $region35: #{att_dest.1} parent=32 // pred_check_branch
        %1540 = sbr.rel (0) target = $region37
      $region36: #{att_dest.1} parent=32 // pred_region
        // Predicated region
        $region38: #{att_dest.1} parent=36 // pred_check
          _
        $region39: #{att_dest.1} parent=36 // pred_check_branch
          %1542 = sbr.rel (0) target = $region41
        $region40: #{att_dest.1} parent=36 // pred_region
          loop: start=0, step=1, limit=1
          $region42: #{att_dest.1} parent=40 // loop_pre_header
            _
          $region43: #{att_dest.1} parent=40 // loop_header
            %s1544 = sphi 0, %s1548
            %p1545 = scmp.ge.s32.totalorder %s1544, 1
            %s1549 = sphi [#allocation4], [#allocation4]
            %s1550 = sphi %s7, %s7
          $region44: #{att_dest.1} parent=40 // loop_header_branch
            %1547 = sbr.rel (%p1545) target = $region48
          $region45: #{att_dest.1} parent=40 // loop_body
            %v1551 = vld [vmem:[%s1549] sm:$0xff]
            %1552 = vst [vmem:[%s1550] sm:$0xff] %v1551
            %v1553 = vld [vmem:[%s1549 + $0x8] sm:$0xff]
            %1554 = vst [vmem:[%s1550 + $0x8] sm:$0xff] %v1553
            %v1555 = vld [vmem:[%s1549 + $0x10] sm:$0xff]
            %1556 = vst [vmem:[%s1550 + $0x10] sm:$0xff] %v1555
          $region46: #{att_dest.1} parent=40 // loop_footer
            %s1548 = sadd.s32 1, %s1544
          $region47: #{att_dest.1} parent=40 // loop_footer_branch
            %1543 = sbr.rel target = $region43
          $region48: #{att_dest.1} parent=40 // loop_exit
            _
        $region41: #{att_dest.1} parent=36 // pred_fallthru
          _
        // Predicated region
        $region49: #{att_dest.1} parent=36 // pred_check
          _
        $region50: #{att_dest.1} parent=36 // pred_check_branch
          %1558 = sbr.rel target = $region52
        $region51: #{att_dest.1} parent=36 // pred_region
          _
        $region52: #{att_dest.1} parent=36 // pred_fallthru
          _
      $region37: #{att_dest.1} parent=32 // pred_fallthru
        _
      %1559 = vnop
    $region33: #{att_dest.1} parent=1 // pred_fallthru
      _
    // Predicated region
    $region53: #{att_dest.1} parent=1 // pred_check
      _
    $region54: #{att_dest.1} parent=1 // pred_check_branch
      %1561 = sbr.rel (0) target = $region56
    $region55: #{att_dest.1} parent=1 // pred_region
      _
    $region56: #{att_dest.1} parent=1 // pred_fallthru
      _

</llo_original>
